<compile_context>
chip_gen: v7x
topology: tpu7x:2x2x1
jax: 0.10.0
libtpu: 0.0.40
codegen_flags: <defaults>
</compile_context>

<pallas_src>
import functools

import jax
import jax.numpy as jnp
from jax import lax
from jax.experimental import pallas as pl
from jax.experimental.pallas import tpu as pltpu


# ------------------------------ fused kernel -------------------------------- #

def _make_fused_kernel(*, n_layers, T, B, H, E, V, C):
    N = T * B
    G = 4 * H

    def kernel(*refs):
        (ids_ref, emb_ref), rest = refs[:2], refs[2:]
        lstm_refs = rest[:3 * n_layers]                     # (wih, whh, b) per layer
        h0_ref = rest[3 * n_layers]
        c0_ref = rest[3 * n_layers + 1]
        (w1_ref, b1_ref, w2_ref, b2_ref,
         w3_ref, b3_ref) = rest[3 * n_layers + 2: 3 * n_layers + 8]
        logits_ref, hT_ref, cT_ref = rest[3 * n_layers + 8: 3 * n_layers + 11]
        y_ref = rest[3 * n_layers + 11]                     # (N, H) f32 scratch

        # ---- embedding lookup as a one-hot matmul (table lives in VMEM) ----
        ids = ids_ref[...]                                   # (N, 1) int32
        vocab_iota = lax.broadcasted_iota(jnp.int32, (N, V), 1)
        one_hot = (vocab_iota == ids).astype(jnp.float32)    # (N, V)
        x = jnp.dot(one_hot, emb_ref[...],
                    preferred_element_type=jnp.float32)      # (N, E) f32

        # g-gate lane mask (PyTorch gate order i, f, g, o); hoisted, reused.
        col = lax.broadcasted_iota(jnp.int32, (B, G), 1)
        is_g = (col >= 2 * H) & (col < 3 * H)

        for l in range(n_layers):
            wih_ref = lstm_refs[3 * l]
            whh_ref = lstm_refs[3 * l + 1]
            b_ref = lstm_refs[3 * l + 2]

            # Hoisted input projection: one GEMM for the whole sequence,
            # bias (b_ih + b_hh, pre-fused) added once outside the time loop.
            xp = jnp.dot(x.astype(jnp.bfloat16), wih_ref[...],
                         preferred_element_type=jnp.float32) + b_ref[...]   # (N, G)
            whh = whh_ref[...]                                # (H, G) bf16, hoisted load

            h = h0_ref[l]                                     # (B, H) f32
            c = c0_ref[l]                                     # (B, H) f32

            # Fully unrolled time loop: only h @ W_hh on the critical path.
            for t in range(T):
                gates = xp[t * B:(t + 1) * B, :] + jnp.dot(
                    h.astype(jnp.bfloat16), whh,
                    preferred_element_type=jnp.float32)       # (B, 4H) f32
                # full-vreg sigmoid + tanh, one select to pick the g lanes
                act = jnp.where(is_g, jnp.tanh(gates), jax.nn.sigmoid(gates))
                i_g = act[:, 0:H]
                f_g = act[:, H:2 * H]
                g_g = act[:, 2 * H:3 * H]
                o_g = act[:, 3 * H:4 * H]
                c = f_g * c + i_g * g_g
                h = o_g * jnp.tanh(c)
                y_ref[t * B:(t + 1) * B, :] = h               # static-offset store

            hT_ref[l] = h
            cT_ref[l] = c
            x = y_ref[...]                                    # (N, H) -> next layer / head

        # ---- fc -> GELU -> fc2 -> GELU -> fc3 (erf GELU == torch default) ----
        def gelu(v):
            return 0.5 * v * (1.0 + lax.erf(v * 0.7071067811865476))

        h1 = gelu(jnp.dot(x.astype(jnp.bfloat16), w1_ref[...],
                          preferred_element_type=jnp.float32) + b1_ref[...])
        h2 = gelu(jnp.dot(h1.astype(jnp.bfloat16), w2_ref[...],
                          preferred_element_type=jnp.float32) + b2_ref[...])
        logits_ref[...] = (jnp.dot(h2.astype(jnp.bfloat16), w3_ref[...],
                                   preferred_element_type=jnp.float32)
                           + b3_ref[...])

    return kernel


# ------------------------------ pallas_call wrapper ------------------------- #

def _full_spec(shape):
    n = len(shape)
    return pl.BlockSpec(shape, lambda i, n=n: (0,) * n)


def char_lstm_forward(params, input_ids, hidden, *, n_layers, hidden_size,
                      n_class):
    h0, c0 = hidden                                  # each (n_layers, B, H) f32
    B, T = input_ids.shape
    H = hidden_size
    N = T * B
    V, E = params["emb"].shape

    # time-major-flat indices: row n = t*B + b  (int reshape/transpose is glue)
    ids_tm = input_ids.T.reshape(N, 1).astype(jnp.int32)

    kernel = _make_fused_kernel(n_layers=n_layers, T=T, B=B, H=H, E=E, V=V,
                                C=n_class)

    inputs = [ids_tm, params["emb"]]
    for l in range(n_layers):
        inputs += [params[f"wih_{l}"], params[f"whh_{l}"], params[f"b_{l}"]]
    inputs += [h0, c0,
               params["w1"], params["b1"],
               params["w2"], params["b2"],
               params["w3"], params["b3"]]

    out_shape = (jax.ShapeDtypeStruct((N, n_class), jnp.float32),
                 jax.ShapeDtypeStruct((n_layers, B, H), jnp.float32),
                 jax.ShapeDtypeStruct((n_layers, B, H), jnp.float32))

    logits_tm, hT, cT = pl.pallas_call(
        kernel,
        out_shape=out_shape,
        grid=(1,),
        in_specs=[_full_spec(x.shape) for x in inputs],
        out_specs=(_full_spec((N, n_class)),
                   _full_spec((n_layers, B, H)),
                   _full_spec((n_layers, B, H))),
        scratch_shapes=[pltpu.VMEM((N, H), jnp.float32)],
        compiler_params=pltpu.CompilerParams(
            dimension_semantics=("arbitrary",)),
    )(*inputs)

    # reorder rows (t*B + b) -> PyTorch batch_first flatten (b*T + t)
    logits = logits_tm.reshape(T, B, n_class).transpose(1, 0, 2)
    logits = logits.reshape(B * T, n_class)
    return logits, (hT, cT)


# ------------------------------ params -------------------------------------- #

def init_params(key, input_size, embed_size, hidden_size, n_class, n_layers):
    H = hidden_size
    H4 = H // 4
    H16 = H // 16
    keys = list(jax.random.split(key, 1 + 4 * n_layers + 6))
    ki = iter(keys)

    def unif(k, shape, scale):
        return jax.random.uniform(k, shape, jnp.float32, -scale, scale)

    params = {"emb": jax.random.normal(next(ki), (input_size, embed_size),
                                       jnp.float32)}
    s = 1.0 / float(H) ** 0.5
    for l in range(n_layers):
        in_l = embed_size if l == 0 else H
        # pre-transposed (in, 4H)/(H, 4H) layout, bf16 MXU operands
        params[f"wih_{l}"] = unif(next(ki), (in_l, 4 * H), s).astype(jnp.bfloat16)
        params[f"whh_{l}"] = unif(next(ki), (H, 4 * H), s).astype(jnp.bfloat16)
        b_ih = unif(next(ki), (4 * H,), s)
        b_hh = unif(next(ki), (4 * H,), s)
        params[f"b_{l}"] = (b_ih + b_hh).reshape(1, -1)       # pre-fused, f32

    params["w1"] = unif(next(ki), (H, H4), 1.0 / float(H) ** 0.5).astype(jnp.bfloat16)
    params["b1"] = unif(next(ki), (1, H4), 1.0 / float(H) ** 0.5)
    params["w2"] = unif(next(ki), (H4, H16), 1.0 / float(H4) ** 0.5).astype(jnp.bfloat16)
    params["b2"] = unif(next(ki), (1, H16), 1.0 / float(H4) ** 0.5)
    params["w3"] = unif(next(ki), (H16, n_class), 1.0 / float(H16) ** 0.5).astype(jnp.bfloat16)
    params["b3"] = unif(next(ki), (1, n_class), 1.0 / float(H16) ** 0.5)
    return params


# ------------------------------ main ---------------------------------------- #

if __name__ == "__main__":
    input_size = 64     # vocab
    embed_size = 16
    hidden_size = 32
    n_class = 8
    n_layers = 2
    batch = 2
    seq = 8

    key = jax.random.PRNGKey(0)
    k_param, k_in = jax.random.split(key)
    params = init_params(k_param, input_size, embed_size, hidden_size,
                         n_class, n_layers)

    input_ids = jax.random.randint(k_in, (batch, seq), 0, input_size,
                                   dtype=jnp.int32)
    hidden0 = (jnp.zeros((n_layers, batch, hidden_size), jnp.float32),
               jnp.zeros((n_layers, batch, hidden_size), jnp.float32))

    fwd = jax.jit(functools.partial(char_lstm_forward,
                                    n_layers=n_layers,
                                    hidden_size=hidden_size,
                                    n_class=n_class))
    logits, (h_out, c_out) = fwd(params, input_ids, hidden0)
    jax.block_until_ready((logits, h_out, c_out))

    assert logits.shape == (batch * seq, n_class)
    assert h_out.shape == (n_layers, batch, hidden_size)
    assert c_out.shape == (n_layers, batch, hidden_size)
    print("KERNEL_OK")
</pallas_src>

<mosaic_0001>
module attributes {stable_mosaic.version = 11 : i64} {
  func.func @kernel(%arg0: i32, %arg1: memref<16x1xi32, #tpu.memory_space<vmem>>, %arg2: memref<64x16xf32, #tpu.memory_space<vmem>>, %arg3: memref<16x128xbf16, #tpu.memory_space<vmem>>, %arg4: memref<32x128xbf16, #tpu.memory_space<vmem>>, %arg5: memref<1x128xf32, #tpu.memory_space<vmem>>, %arg6: memref<32x128xbf16, #tpu.memory_space<vmem>>, %arg7: memref<32x128xbf16, #tpu.memory_space<vmem>>, %arg8: memref<1x128xf32, #tpu.memory_space<vmem>>, %arg9: memref<2x2x32xf32, #tpu.memory_space<vmem>>, %arg10: memref<2x2x32xf32, #tpu.memory_space<vmem>>, %arg11: memref<32x8xbf16, #tpu.memory_space<vmem>>, %arg12: memref<1x8xf32, #tpu.memory_space<vmem>>, %arg13: memref<8x2xbf16, #tpu.memory_space<vmem>>, %arg14: memref<1x2xf32, #tpu.memory_space<vmem>>, %arg15: memref<2x8xbf16, #tpu.memory_space<vmem>>, %arg16: memref<1x8xf32, #tpu.memory_space<vmem>>, %arg17: memref<16x8xf32, #tpu.memory_space<vmem>>, %arg18: memref<2x2x32xf32, #tpu.memory_space<vmem>>, %arg19: memref<2x2x32xf32, #tpu.memory_space<vmem>>, %arg20: memref<16x32xf32, #tpu.memory_space<vmem>>) attributes {dimension_semantics = [#tpu.dimension_semantics<arbitrary>], iteration_bounds = array<i64: 1>, scalar_prefetch = 0 : i64, scratch_operands = 1 : i64, tpu.core_type = #tpu.core_type<tc>, window_params = [{pipeline_mode = #tpu.pipeline_mode<synchronous>, transform_indices = @transform_0, window_bounds = array<i64: 16, 1>}, {pipeline_mode = #tpu.pipeline_mode<synchronous>, transform_indices = @transform_1, window_bounds = array<i64: 64, 16>}, {pipeline_mode = #tpu.pipeline_mode<synchronous>, transform_indices = @transform_2, window_bounds = array<i64: 16, 128>}, {pipeline_mode = #tpu.pipeline_mode<synchronous>, transform_indices = @transform_3, window_bounds = array<i64: 32, 128>}, {pipeline_mode = #tpu.pipeline_mode<synchronous>, transform_indices = @transform_4, window_bounds = array<i64: 1, 128>}, {pipeline_mode = #tpu.pipeline_mode<synchronous>, transform_indices = @transform_5, window_bounds = array<i64: 32, 128>}, {pipeline_mode = #tpu.pipeline_mode<synchronous>, transform_indices = @transform_6, window_bounds = array<i64: 32, 128>}, {pipeline_mode = #tpu.pipeline_mode<synchronous>, transform_indices = @transform_7, window_bounds = array<i64: 1, 128>}, {pipeline_mode = #tpu.pipeline_mode<synchronous>, transform_indices = @transform_8, window_bounds = array<i64: 2, 2, 32>}, {pipeline_mode = #tpu.pipeline_mode<synchronous>, transform_indices = @transform_9, window_bounds = array<i64: 2, 2, 32>}, {pipeline_mode = #tpu.pipeline_mode<synchronous>, transform_indices = @transform_10, window_bounds = array<i64: 32, 8>}, {pipeline_mode = #tpu.pipeline_mode<synchronous>, transform_indices = @transform_11, window_bounds = array<i64: 1, 8>}, {pipeline_mode = #tpu.pipeline_mode<synchronous>, transform_indices = @transform_12, window_bounds = array<i64: 8, 2>}, {pipeline_mode = #tpu.pipeline_mode<synchronous>, transform_indices = @transform_13, window_bounds = array<i64: 1, 2>}, {pipeline_mode = #tpu.pipeline_mode<synchronous>, transform_indices = @transform_14, window_bounds = array<i64: 2, 8>}, {pipeline_mode = #tpu.pipeline_mode<synchronous>, transform_indices = @transform_15, window_bounds = array<i64: 1, 8>}, {pipeline_mode = #tpu.pipeline_mode<synchronous>, transform_indices = @transform_16, window_bounds = array<i64: 16, 8>}, {pipeline_mode = #tpu.pipeline_mode<synchronous>, transform_indices = @transform_17, window_bounds = array<i64: 2, 2, 32>}, {pipeline_mode = #tpu.pipeline_mode<synchronous>, transform_indices = @transform_18, window_bounds = array<i64: 2, 2, 32>}]} {
    %c0 = arith.constant 0 : index
    %c0_0 = arith.constant 0 : index
    %0 = vector.load %arg1[%c0, %c0_0] : memref<16x1xi32, #tpu.memory_space<vmem>>, vector<16x1xi32>
    %1 = tpu.iota {dimensions = array<i32: 1>} : vector<16x64xi32>
    %2 = vector.broadcast %0 : vector<16x1xi32> to vector<16x64xi32>
    %3 = arith.cmpi eq, %1, %2 : vector<16x64xi32>
    %4 = arith.extui %3 : vector<16x64xi1> to vector<16x64xi32>
    %5 = arith.sitofp %4 : vector<16x64xi32> to vector<16x64xf32>
    %c0_1 = arith.constant 0 : index
    %c0_2 = arith.constant 0 : index
    %6 = vector.load %arg2[%c0_1, %c0_2] : memref<64x16xf32, #tpu.memory_space<vmem>>, vector<64x16xf32>
    %cst = arith.constant dense<0.000000e+00> : vector<16x16xf32>
    %7 = tpu.matmul %5, %6, %cst {dimension_numbers = #tpu.dot_dimension_numbers<[1], [0], [0], [1], [0, 0, 1, 1], [], []>} : vector<16x64xf32>, vector<64x16xf32>, vector<16x16xf32> -> vector<16x16xf32>
    %8 = tpu.iota {dimensions = array<i32: 1>} : vector<2x128xi32>
    %c64_i32 = arith.constant 64 : i32
    %9 = vector.broadcast %c64_i32 : i32 to vector<2x128xi32>
    %10 = arith.cmpi sge, %8, %9 : vector<2x128xi32>
    %c96_i32 = arith.constant 96 : i32
    %11 = vector.broadcast %c96_i32 : i32 to vector<2x128xi32>
    %12 = arith.cmpi slt, %8, %11 : vector<2x128xi32>
    %13 = arith.andi %10, %12 : vector<2x128xi1>
    %14 = arith.truncf %7 : vector<16x16xf32> to vector<16x16xbf16>
    %c0_3 = arith.constant 0 : index
    %c0_4 = arith.constant 0 : index
    %15 = vector.load %arg3[%c0_3, %c0_4] : memref<16x128xbf16, #tpu.memory_space<vmem>>, vector<16x128xbf16>
    %cst_5 = arith.constant dense<0.000000e+00> : vector<16x128xf32>
    %16 = tpu.matmul %14, %15, %cst_5 {dimension_numbers = #tpu.dot_dimension_numbers<[1], [0], [0], [1], [0, 0, 1, 1], [], []>} : vector<16x16xbf16>, vector<16x128xbf16>, vector<16x128xf32> -> vector<16x128xf32>
    %c0_6 = arith.constant 0 : index
    %c0_7 = arith.constant 0 : index
    %17 = vector.load %arg5[%c0_6, %c0_7] : memref<1x128xf32, #tpu.memory_space<vmem>>, vector<1x128xf32>
    %18 = vector.broadcast %17 : vector<1x128xf32> to vector<16x128xf32>
    %19 = arith.addf %16, %18 : vector<16x128xf32>
    %c0_8 = arith.constant 0 : index
    %c0_9 = arith.constant 0 : index
    %20 = vector.load %arg4[%c0_8, %c0_9] : memref<32x128xbf16, #tpu.memory_space<vmem>>, vector<32x128xbf16>
    %c0_10 = arith.constant 0 : index
    %c0_11 = arith.constant 0 : index
    %c0_12 = arith.constant 0 : index
    %21 = vector.load %arg9[%c0_10, %c0_11, %c0_12] : memref<2x2x32xf32, #tpu.memory_space<vmem>>, vector<1x2x32xf32>
    %22 = vector.shape_cast %21 : vector<1x2x32xf32> to vector<2x32xf32>
    %c0_13 = arith.constant 0 : index
    %c0_14 = arith.constant 0 : index
    %c0_15 = arith.constant 0 : index
    %23 = vector.load %arg10[%c0_13, %c0_14, %c0_15] : memref<2x2x32xf32, #tpu.memory_space<vmem>>, vector<1x2x32xf32>
    %24 = vector.shape_cast %23 : vector<1x2x32xf32> to vector<2x32xf32>
    %25 = vector.extract_strided_slice %19 {offsets = [0, 0], sizes = [2, 128], strides = [1, 1]} : vector<16x128xf32> to vector<2x128xf32>
    %26 = arith.truncf %22 : vector<2x32xf32> to vector<2x32xbf16>
    %cst_16 = arith.constant dense<0.000000e+00> : vector<2x128xf32>
    %27 = tpu.matmul %26, %20, %cst_16 {dimension_numbers = #tpu.dot_dimension_numbers<[1], [0], [0], [1], [0, 0, 1, 1], [], []>} : vector<2x32xbf16>, vector<32x128xbf16>, vector<2x128xf32> -> vector<2x128xf32>
    %28 = arith.addf %25, %27 : vector<2x128xf32>
    %29 = math.tanh %28 : vector<2x128xf32>
    %30 = arith.negf %28 : vector<2x128xf32>
    %31 = math.exp %30 : vector<2x128xf32>
    %cst_17 = arith.constant 1.000000e+00 : f32
    %32 = vector.broadcast %cst_17 : f32 to vector<2x128xf32>
    %33 = arith.addf %32, %31 : vector<2x128xf32>
    %34 = arith.divf %32, %33 : vector<2x128xf32>
    %35 = arith.select %13, %29, %34 : vector<2x128xi1>, vector<2x128xf32>
    %36 = vector.extract_strided_slice %35 {offsets = [0, 0], sizes = [2, 32], strides = [1, 1]} : vector<2x128xf32> to vector<2x32xf32>
    %37 = vector.extract_strided_slice %35 {offsets = [0, 32], sizes = [2, 32], strides = [1, 1]} : vector<2x128xf32> to vector<2x32xf32>
    %38 = vector.extract_strided_slice %35 {offsets = [0, 64], sizes = [2, 32], strides = [1, 1]} : vector<2x128xf32> to vector<2x32xf32>
    %39 = vector.extract_strided_slice %35 {offsets = [0, 96], sizes = [2, 32], strides = [1, 1]} : vector<2x128xf32> to vector<2x32xf32>
    %40 = arith.mulf %37, %24 : vector<2x32xf32>
    %41 = arith.mulf %36, %38 : vector<2x32xf32>
    %42 = arith.addf %40, %41 : vector<2x32xf32>
    %43 = math.tanh %42 : vector<2x32xf32>
    %44 = arith.mulf %39, %43 : vector<2x32xf32>
    %c0_18 = arith.constant 0 : index
    %c0_19 = arith.constant 0 : index
    %45 = vector.load %arg20[%c0_18, %c0_19] : memref<16x32xf32, #tpu.memory_space<vmem>>, vector<2x32xf32>
    tpu.vector_store %arg20[%c0_18, %c0_19], %44 {strides = array<i32>} : memref<16x32xf32, #tpu.memory_space<vmem>>, vector<2x32xf32>,
    %46 = vector.extract_strided_slice %19 {offsets = [2, 0], sizes = [2, 128], strides = [1, 1]} : vector<16x128xf32> to vector<2x128xf32>
    %47 = arith.truncf %44 : vector<2x32xf32> to vector<2x32xbf16>
    %cst_20 = arith.constant dense<0.000000e+00> : vector<2x128xf32>
    %48 = tpu.matmul %47, %20, %cst_20 {dimension_numbers = #tpu.dot_dimension_numbers<[1], [0], [0], [1], [0, 0, 1, 1], [], []>} : vector<2x32xbf16>, vector<32x128xbf16>, vector<2x128xf32> -> vector<2x128xf32>
    %49 = arith.addf %46, %48 : vector<2x128xf32>
    %50 = math.tanh %49 : vector<2x128xf32>
    %51 = arith.negf %49 : vector<2x128xf32>
    %52 = math.exp %51 : vector<2x128xf32>
    %cst_21 = arith.constant 1.000000e+00 : f32
    %53 = vector.broadcast %cst_21 : f32 to vector<2x128xf32>
    %54 = arith.addf %53, %52 : vector<2x128xf32>
    %55 = arith.divf %53, %54 : vector<2x128xf32>
    %56 = arith.select %13, %50, %55 : vector<2x128xi1>, vector<2x128xf32>
    %57 = vector.extract_strided_slice %56 {offsets = [0, 0], sizes = [2, 32], strides = [1, 1]} : vector<2x128xf32> to vector<2x32xf32>
    %58 = vector.extract_strided_slice %56 {offsets = [0, 32], sizes = [2, 32], strides = [1, 1]} : vector<2x128xf32> to vector<2x32xf32>
    %59 = vector.extract_strided_slice %56 {offsets = [0, 64], sizes = [2, 32], strides = [1, 1]} : vector<2x128xf32> to vector<2x32xf32>
    %60 = vector.extract_strided_slice %56 {offsets = [0, 96], sizes = [2, 32], strides = [1, 1]} : vector<2x128xf32> to vector<2x32xf32>
    %61 = arith.mulf %58, %42 : vector<2x32xf32>
    %62 = arith.mulf %57, %59 : vector<2x32xf32>
    %63 = arith.addf %61, %62 : vector<2x32xf32>
    %64 = math.tanh %63 : vector<2x32xf32>
    %65 = arith.mulf %60, %64 : vector<2x32xf32>
    %c2 = arith.constant 2 : index
    %c0_22 = arith.constant 0 : index
    %66 = vector.load %arg20[%c2, %c0_22] : memref<16x32xf32, #tpu.memory_space<vmem>>, vector<2x32xf32>
    tpu.vector_store %arg20[%c2, %c0_22], %65 {strides = array<i32>} : memref<16x32xf32, #tpu.memory_space<vmem>>, vector<2x32xf32>,
    %67 = vector.extract_strided_slice %19 {offsets = [4, 0], sizes = [2, 128], strides = [1, 1]} : vector<16x128xf32> to vector<2x128xf32>
    %68 = arith.truncf %65 : vector<2x32xf32> to vector<2x32xbf16>
    %cst_23 = arith.constant dense<0.000000e+00> : vector<2x128xf32>
    %69 = tpu.matmul %68, %20, %cst_23 {dimension_numbers = #tpu.dot_dimension_numbers<[1], [0], [0], [1], [0, 0, 1, 1], [], []>} : vector<2x32xbf16>, vector<32x128xbf16>, vector<2x128xf32> -> vector<2x128xf32>
    %70 = arith.addf %67, %69 : vector<2x128xf32>
    %71 = math.tanh %70 : vector<2x128xf32>
    %72 = arith.negf %70 : vector<2x128xf32>
    %73 = math.exp %72 : vector<2x128xf32>
    %cst_24 = arith.constant 1.000000e+00 : f32
    %74 = vector.broadcast %cst_24 : f32 to vector<2x128xf32>
    %75 = arith.addf %74, %73 : vector<2x128xf32>
    %76 = arith.divf %74, %75 : vector<2x128xf32>
    %77 = arith.select %13, %71, %76 : vector<2x128xi1>, vector<2x128xf32>
    %78 = vector.extract_strided_slice %77 {offsets = [0, 0], sizes = [2, 32], strides = [1, 1]} : vector<2x128xf32> to vector<2x32xf32>
    %79 = vector.extract_strided_slice %77 {offsets = [0, 32], sizes = [2, 32], strides = [1, 1]} : vector<2x128xf32> to vector<2x32xf32>
    %80 = vector.extract_strided_slice %77 {offsets = [0, 64], sizes = [2, 32], strides = [1, 1]} : vector<2x128xf32> to vector<2x32xf32>
    %81 = vector.extract_strided_slice %77 {offsets = [0, 96], sizes = [2, 32], strides = [1, 1]} : vector<2x128xf32> to vector<2x32xf32>
    %82 = arith.mulf %79, %63 : vector<2x32xf32>
    %83 = arith.mulf %78, %80 : vector<2x32xf32>
    %84 = arith.addf %82, %83 : vector<2x32xf32>
    %85 = math.tanh %84 : vector<2x32xf32>
    %86 = arith.mulf %81, %85 : vector<2x32xf32>
    %c4 = arith.constant 4 : index
    %c0_25 = arith.constant 0 : index
    %87 = vector.load %arg20[%c4, %c0_25] : memref<16x32xf32, #tpu.memory_space<vmem>>, vector<2x32xf32>
    tpu.vector_store %arg20[%c4, %c0_25], %86 {strides = array<i32>} : memref<16x32xf32, #tpu.memory_space<vmem>>, vector<2x32xf32>,
    %88 = vector.extract_strided_slice %19 {offsets = [6, 0], sizes = [2, 128], strides = [1, 1]} : vector<16x128xf32> to vector<2x128xf32>
    %89 = arith.truncf %86 : vector<2x32xf32> to vector<2x32xbf16>
    %cst_26 = arith.constant dense<0.000000e+00> : vector<2x128xf32>
    %90 = tpu.matmul %89, %20, %cst_26 {dimension_numbers = #tpu.dot_dimension_numbers<[1], [0], [0], [1], [0, 0, 1, 1], [], []>} : vector<2x32xbf16>, vector<32x128xbf16>, vector<2x128xf32> -> vector<2x128xf32>
    %91 = arith.addf %88, %90 : vector<2x128xf32>
    %92 = math.tanh %91 : vector<2x128xf32>
    %93 = arith.negf %91 : vector<2x128xf32>
    %94 = math.exp %93 : vector<2x128xf32>
    %cst_27 = arith.constant 1.000000e+00 : f32
    %95 = vector.broadcast %cst_27 : f32 to vector<2x128xf32>
    %96 = arith.addf %95, %94 : vector<2x128xf32>
    %97 = arith.divf %95, %96 : vector<2x128xf32>
    %98 = arith.select %13, %92, %97 : vector<2x128xi1>, vector<2x128xf32>
    %99 = vector.extract_strided_slice %98 {offsets = [0, 0], sizes = [2, 32], strides = [1, 1]} : vector<2x128xf32> to vector<2x32xf32>
    %100 = vector.extract_strided_slice %98 {offsets = [0, 32], sizes = [2, 32], strides = [1, 1]} : vector<2x128xf32> to vector<2x32xf32>
    %101 = vector.extract_strided_slice %98 {offsets = [0, 64], sizes = [2, 32], strides = [1, 1]} : vector<2x128xf32> to vector<2x32xf32>
    %102 = vector.extract_strided_slice %98 {offsets = [0, 96], sizes = [2, 32], strides = [1, 1]} : vector<2x128xf32> to vector<2x32xf32>
    %103 = arith.mulf %100, %84 : vector<2x32xf32>
    %104 = arith.mulf %99, %101 : vector<2x32xf32>
    %105 = arith.addf %103, %104 : vector<2x32xf32>
    %106 = math.tanh %105 : vector<2x32xf32>
    %107 = arith.mulf %102, %106 : vector<2x32xf32>
    %c6 = arith.constant 6 : index
    %c0_28 = arith.constant 0 : index
    %108 = vector.load %arg20[%c6, %c0_28] : memref<16x32xf32, #tpu.memory_space<vmem>>, vector<2x32xf32>
    tpu.vector_store %arg20[%c6, %c0_28], %107 {strides = array<i32>} : memref<16x32xf32, #tpu.memory_space<vmem>>, vector<2x32xf32>,
    %109 = vector.extract_strided_slice %19 {offsets = [8, 0], sizes = [2, 128], strides = [1, 1]} : vector<16x128xf32> to vector<2x128xf32>
    %110 = arith.truncf %107 : vector<2x32xf32> to vector<2x32xbf16>
    %cst_29 = arith.constant dense<0.000000e+00> : vector<2x128xf32>
    %111 = tpu.matmul %110, %20, %cst_29 {dimension_numbers = #tpu.dot_dimension_numbers<[1], [0], [0], [1], [0, 0, 1, 1], [], []>} : vector<2x32xbf16>, vector<32x128xbf16>, vector<2x128xf32> -> vector<2x128xf32>
    %112 = arith.addf %109, %111 : vector<2x128xf32>
    %113 = math.tanh %112 : vector<2x128xf32>
    %114 = arith.negf %112 : vector<2x128xf32>
    %115 = math.exp %114 : vector<2x128xf32>
    %cst_30 = arith.constant 1.000000e+00 : f32
    %116 = vector.broadcast %cst_30 : f32 to vector<2x128xf32>
    %117 = arith.addf %116, %115 : vector<2x128xf32>
    %118 = arith.divf %116, %117 : vector<2x128xf32>
    %119 = arith.select %13, %113, %118 : vector<2x128xi1>, vector<2x128xf32>
    %120 = vector.extract_strided_slice %119 {offsets = [0, 0], sizes = [2, 32], strides = [1, 1]} : vector<2x128xf32> to vector<2x32xf32>
    %121 = vector.extract_strided_slice %119 {offsets = [0, 32], sizes = [2, 32], strides = [1, 1]} : vector<2x128xf32> to vector<2x32xf32>
    %122 = vector.extract_strided_slice %119 {offsets = [0, 64], sizes = [2, 32], strides = [1, 1]} : vector<2x128xf32> to vector<2x32xf32>
    %123 = vector.extract_strided_slice %119 {offsets = [0, 96], sizes = [2, 32], strides = [1, 1]} : vector<2x128xf32> to vector<2x32xf32>
    %124 = arith.mulf %121, %105 : vector<2x32xf32>
    %125 = arith.mulf %120, %122 : vector<2x32xf32>
    %126 = arith.addf %124, %125 : vector<2x32xf32>
    %127 = math.tanh %126 : vector<2x32xf32>
    %128 = arith.mulf %123, %127 : vector<2x32xf32>
    %c8 = arith.constant 8 : index
    %c0_31 = arith.constant 0 : index
    %129 = vector.load %arg20[%c8, %c0_31] : memref<16x32xf32, #tpu.memory_space<vmem>>, vector<2x32xf32>
    tpu.vector_store %arg20[%c8, %c0_31], %128 {strides = array<i32>} : memref<16x32xf32, #tpu.memory_space<vmem>>, vector<2x32xf32>,
    %130 = vector.extract_strided_slice %19 {offsets = [10, 0], sizes = [2, 128], strides = [1, 1]} : vector<16x128xf32> to vector<2x128xf32>
    %131 = arith.truncf %128 : vector<2x32xf32> to vector<2x32xbf16>
    %cst_32 = arith.constant dense<0.000000e+00> : vector<2x128xf32>
    %132 = tpu.matmul %131, %20, %cst_32 {dimension_numbers = #tpu.dot_dimension_numbers<[1], [0], [0], [1], [0, 0, 1, 1], [], []>} : vector<2x32xbf16>, vector<32x128xbf16>, vector<2x128xf32> -> vector<2x128xf32>
    %133 = arith.addf %130, %132 : vector<2x128xf32>
    %134 = math.tanh %133 : vector<2x128xf32>
    %135 = arith.negf %133 : vector<2x128xf32>
    %136 = math.exp %135 : vector<2x128xf32>
    %cst_33 = arith.constant 1.000000e+00 : f32
    %137 = vector.broadcast %cst_33 : f32 to vector<2x128xf32>
    %138 = arith.addf %137, %136 : vector<2x128xf32>
    %139 = arith.divf %137, %138 : vector<2x128xf32>
    %140 = arith.select %13, %134, %139 : vector<2x128xi1>, vector<2x128xf32>
    %141 = vector.extract_strided_slice %140 {offsets = [0, 0], sizes = [2, 32], strides = [1, 1]} : vector<2x128xf32> to vector<2x32xf32>
    %142 = vector.extract_strided_slice %140 {offsets = [0, 32], sizes = [2, 32], strides = [1, 1]} : vector<2x128xf32> to vector<2x32xf32>
    %143 = vector.extract_strided_slice %140 {offsets = [0, 64], sizes = [2, 32], strides = [1, 1]} : vector<2x128xf32> to vector<2x32xf32>
    %144 = vector.extract_strided_slice %140 {offsets = [0, 96], sizes = [2, 32], strides = [1, 1]} : vector<2x128xf32> to vector<2x32xf32>
    %145 = arith.mulf %142, %126 : vector<2x32xf32>
    %146 = arith.mulf %141, %143 : vector<2x32xf32>
    %147 = arith.addf %145, %146 : vector<2x32xf32>
    %148 = math.tanh %147 : vector<2x32xf32>
    %149 = arith.mulf %144, %148 : vector<2x32xf32>
    %c10 = arith.constant 10 : index
    %c0_34 = arith.constant 0 : index
    %150 = vector.load %arg20[%c10, %c0_34] : memref<16x32xf32, #tpu.memory_space<vmem>>, vector<2x32xf32>
    tpu.vector_store %arg20[%c10, %c0_34], %149 {strides = array<i32>} : memref<16x32xf32, #tpu.memory_space<vmem>>, vector<2x32xf32>,
    %151 = vector.extract_strided_slice %19 {offsets = [12, 0], sizes = [2, 128], strides = [1, 1]} : vector<16x128xf32> to vector<2x128xf32>
    %152 = arith.truncf %149 : vector<2x32xf32> to vector<2x32xbf16>
    %cst_35 = arith.constant dense<0.000000e+00> : vector<2x128xf32>
    %153 = tpu.matmul %152, %20, %cst_35 {dimension_numbers = #tpu.dot_dimension_numbers<[1], [0], [0], [1], [0, 0, 1, 1], [], []>} : vector<2x32xbf16>, vector<32x128xbf16>, vector<2x128xf32> -> vector<2x128xf32>
    %154 = arith.addf %151, %153 : vector<2x128xf32>
    %155 = math.tanh %154 : vector<2x128xf32>
    %156 = arith.negf %154 : vector<2x128xf32>
    %157 = math.exp %156 : vector<2x128xf32>
    %cst_36 = arith.constant 1.000000e+00 : f32
    %158 = vector.broadcast %cst_36 : f32 to vector<2x128xf32>
    %159 = arith.addf %158, %157 : vector<2x128xf32>
    %160 = arith.divf %158, %159 : vector<2x128xf32>
    %161 = arith.select %13, %155, %160 : vector<2x128xi1>, vector<2x128xf32>
    %162 = vector.extract_strided_slice %161 {offsets = [0, 0], sizes = [2, 32], strides = [1, 1]} : vector<2x128xf32> to vector<2x32xf32>
    %163 = vector.extract_strided_slice %161 {offsets = [0, 32], sizes = [2, 32], strides = [1, 1]} : vector<2x128xf32> to vector<2x32xf32>
    %164 = vector.extract_strided_slice %161 {offsets = [0, 64], sizes = [2, 32], strides = [1, 1]} : vector<2x128xf32> to vector<2x32xf32>
    %165 = vector.extract_strided_slice %161 {offsets = [0, 96], sizes = [2, 32], strides = [1, 1]} : vector<2x128xf32> to vector<2x32xf32>
    %166 = arith.mulf %163, %147 : vector<2x32xf32>
    %167 = arith.mulf %162, %164 : vector<2x32xf32>
    %168 = arith.addf %166, %167 : vector<2x32xf32>
    %169 = math.tanh %168 : vector<2x32xf32>
    %170 = arith.mulf %165, %169 : vector<2x32xf32>
    %c12 = arith.constant 12 : index
    %c0_37 = arith.constant 0 : index
    %171 = vector.load %arg20[%c12, %c0_37] : memref<16x32xf32, #tpu.memory_space<vmem>>, vector<2x32xf32>
    tpu.vector_store %arg20[%c12, %c0_37], %170 {strides = array<i32>} : memref<16x32xf32, #tpu.memory_space<vmem>>, vector<2x32xf32>,
    %172 = vector.extract_strided_slice %19 {offsets = [14, 0], sizes = [2, 128], strides = [1, 1]} : vector<16x128xf32> to vector<2x128xf32>
    %173 = arith.truncf %170 : vector<2x32xf32> to vector<2x32xbf16>
    %cst_38 = arith.constant dense<0.000000e+00> : vector<2x128xf32>
    %174 = tpu.matmul %173, %20, %cst_38 {dimension_numbers = #tpu.dot_dimension_numbers<[1], [0], [0], [1], [0, 0, 1, 1], [], []>} : vector<2x32xbf16>, vector<32x128xbf16>, vector<2x128xf32> -> vector<2x128xf32>
    %175 = arith.addf %172, %174 : vector<2x128xf32>
    %176 = math.tanh %175 : vector<2x128xf32>
    %177 = arith.negf %175 : vector<2x128xf32>
    %178 = math.exp %177 : vector<2x128xf32>
    %cst_39 = arith.constant 1.000000e+00 : f32
    %179 = vector.broadcast %cst_39 : f32 to vector<2x128xf32>
    %180 = arith.addf %179, %178 : vector<2x128xf32>
    %181 = arith.divf %179, %180 : vector<2x128xf32>
    %182 = arith.select %13, %176, %181 : vector<2x128xi1>, vector<2x128xf32>
    %183 = vector.extract_strided_slice %182 {offsets = [0, 0], sizes = [2, 32], strides = [1, 1]} : vector<2x128xf32> to vector<2x32xf32>
    %184 = vector.extract_strided_slice %182 {offsets = [0, 32], sizes = [2, 32], strides = [1, 1]} : vector<2x128xf32> to vector<2x32xf32>
    %185 = vector.extract_strided_slice %182 {offsets = [0, 64], sizes = [2, 32], strides = [1, 1]} : vector<2x128xf32> to vector<2x32xf32>
    %186 = vector.extract_strided_slice %182 {offsets = [0, 96], sizes = [2, 32], strides = [1, 1]} : vector<2x128xf32> to vector<2x32xf32>
    %187 = arith.mulf %184, %168 : vector<2x32xf32>
    %188 = arith.mulf %183, %185 : vector<2x32xf32>
    %189 = arith.addf %187, %188 : vector<2x32xf32>
    %190 = math.tanh %189 : vector<2x32xf32>
    %191 = arith.mulf %186, %190 : vector<2x32xf32>
    %c14 = arith.constant 14 : index
    %c0_40 = arith.constant 0 : index
    %192 = vector.load %arg20[%c14, %c0_40] : memref<16x32xf32, #tpu.memory_space<vmem>>, vector<2x32xf32>
    tpu.vector_store %arg20[%c14, %c0_40], %191 {strides = array<i32>} : memref<16x32xf32, #tpu.memory_space<vmem>>, vector<2x32xf32>,
    %c0_41 = arith.constant 0 : index
    %c0_42 = arith.constant 0 : index
    %c0_43 = arith.constant 0 : index
    %193 = vector.load %arg18[%c0_41, %c0_42, %c0_43] : memref<2x2x32xf32, #tpu.memory_space<vmem>>, vector<1x2x32xf32>
    %194 = vector.shape_cast %193 : vector<1x2x32xf32> to vector<2x32xf32>
    %195 = vector.shape_cast %191 : vector<2x32xf32> to vector<1x2x32xf32>
    tpu.vector_store %arg18[%c0_41, %c0_42, %c0_43], %195 {strides = array<i32>} : memref<2x2x32xf32, #tpu.memory_space<vmem>>, vector<1x2x32xf32>,
    %c0_44 = arith.constant 0 : index
    %c0_45 = arith.constant 0 : index
    %c0_46 = arith.constant 0 : index
    %196 = vector.load %arg19[%c0_44, %c0_45, %c0_46] : memref<2x2x32xf32, #tpu.memory_space<vmem>>, vector<1x2x32xf32>
    %197 = vector.shape_cast %196 : vector<1x2x32xf32> to vector<2x32xf32>
    %198 = vector.shape_cast %189 : vector<2x32xf32> to vector<1x2x32xf32>
    tpu.vector_store %arg19[%c0_44, %c0_45, %c0_46], %198 {strides = array<i32>} : memref<2x2x32xf32, #tpu.memory_space<vmem>>, vector<1x2x32xf32>,
    %c0_47 = arith.constant 0 : index
    %c0_48 = arith.constant 0 : index
    %199 = vector.load %arg20[%c0_47, %c0_48] : memref<16x32xf32, #tpu.memory_space<vmem>>, vector<16x32xf32>
    %200 = arith.truncf %199 : vector<16x32xf32> to vector<16x32xbf16>
    %c0_49 = arith.constant 0 : index
    %c0_50 = arith.constant 0 : index
    %201 = vector.load %arg6[%c0_49, %c0_50] : memref<32x128xbf16, #tpu.memory_space<vmem>>, vector<32x128xbf16>
    %cst_51 = arith.constant dense<0.000000e+00> : vector<16x128xf32>
    %202 = tpu.matmul %200, %201, %cst_51 {dimension_numbers = #tpu.dot_dimension_numbers<[1], [0], [0], [1], [0, 0, 1, 1], [], []>} : vector<16x32xbf16>, vector<32x128xbf16>, vector<16x128xf32> -> vector<16x128xf32>
    %c0_52 = arith.constant 0 : index
    %c0_53 = arith.constant 0 : index
    %203 = vector.load %arg8[%c0_52, %c0_53] : memref<1x128xf32, #tpu.memory_space<vmem>>, vector<1x128xf32>
    %204 = vector.broadcast %203 : vector<1x128xf32> to vector<16x128xf32>
    %205 = arith.addf %202, %204 : vector<16x128xf32>
    %c0_54 = arith.constant 0 : index
    %c0_55 = arith.constant 0 : index
    %206 = vector.load %arg7[%c0_54, %c0_55] : memref<32x128xbf16, #tpu.memory_space<vmem>>, vector<32x128xbf16>
    %c1 = arith.constant 1 : index
    %c0_56 = arith.constant 0 : index
    %c0_57 = arith.constant 0 : index
    %207 = vector.load %arg9[%c1, %c0_56, %c0_57] : memref<2x2x32xf32, #tpu.memory_space<vmem>>, vector<1x2x32xf32>
    %208 = vector.shape_cast %207 : vector<1x2x32xf32> to vector<2x32xf32>
    %c1_58 = arith.constant 1 : index
    %c0_59 = arith.constant 0 : index
    %c0_60 = arith.constant 0 : index
    %209 = vector.load %arg10[%c1_58, %c0_59, %c0_60] : memref<2x2x32xf32, #tpu.memory_space<vmem>>, vector<1x2x32xf32>
    %210 = vector.shape_cast %209 : vector<1x2x32xf32> to vector<2x32xf32>
    %211 = vector.extract_strided_slice %205 {offsets = [0, 0], sizes = [2, 128], strides = [1, 1]} : vector<16x128xf32> to vector<2x128xf32>
    %212 = arith.truncf %208 : vector<2x32xf32> to vector<2x32xbf16>
    %cst_61 = arith.constant dense<0.000000e+00> : vector<2x128xf32>
    %213 = tpu.matmul %212, %206, %cst_61 {dimension_numbers = #tpu.dot_dimension_numbers<[1], [0], [0], [1], [0, 0, 1, 1], [], []>} : vector<2x32xbf16>, vector<32x128xbf16>, vector<2x128xf32> -> vector<2x128xf32>
    %214 = arith.addf %211, %213 : vector<2x128xf32>
    %215 = math.tanh %214 : vector<2x128xf32>
    %216 = arith.negf %214 : vector<2x128xf32>
    %217 = math.exp %216 : vector<2x128xf32>
    %cst_62 = arith.constant 1.000000e+00 : f32
    %218 = vector.broadcast %cst_62 : f32 to vector<2x128xf32>
    %219 = arith.addf %218, %217 : vector<2x128xf32>
    %220 = arith.divf %218, %219 : vector<2x128xf32>
    %221 = arith.select %13, %215, %220 : vector<2x128xi1>, vector<2x128xf32>
    %222 = vector.extract_strided_slice %221 {offsets = [0, 0], sizes = [2, 32], strides = [1, 1]} : vector<2x128xf32> to vector<2x32xf32>
    %223 = vector.extract_strided_slice %221 {offsets = [0, 32], sizes = [2, 32], strides = [1, 1]} : vector<2x128xf32> to vector<2x32xf32>
    %224 = vector.extract_strided_slice %221 {offsets = [0, 64], sizes = [2, 32], strides = [1, 1]} : vector<2x128xf32> to vector<2x32xf32>
    %225 = vector.extract_strided_slice %221 {offsets = [0, 96], sizes = [2, 32], strides = [1, 1]} : vector<2x128xf32> to vector<2x32xf32>
    %226 = arith.mulf %223, %210 : vector<2x32xf32>
    %227 = arith.mulf %222, %224 : vector<2x32xf32>
    %228 = arith.addf %226, %227 : vector<2x32xf32>
    %229 = math.tanh %228 : vector<2x32xf32>
    %230 = arith.mulf %225, %229 : vector<2x32xf32>
    %c0_63 = arith.constant 0 : index
    %c0_64 = arith.constant 0 : index
    %231 = vector.load %arg20[%c0_63, %c0_64] : memref<16x32xf32, #tpu.memory_space<vmem>>, vector<2x32xf32>
    tpu.vector_store %arg20[%c0_63, %c0_64], %230 {strides = array<i32>} : memref<16x32xf32, #tpu.memory_space<vmem>>, vector<2x32xf32>,
    %232 = vector.extract_strided_slice %205 {offsets = [2, 0], sizes = [2, 128], strides = [1, 1]} : vector<16x128xf32> to vector<2x128xf32>
    %233 = arith.truncf %230 : vector<2x32xf32> to vector<2x32xbf16>
    %cst_65 = arith.constant dense<0.000000e+00> : vector<2x128xf32>
    %234 = tpu.matmul %233, %206, %cst_65 {dimension_numbers = #tpu.dot_dimension_numbers<[1], [0], [0], [1], [0, 0, 1, 1], [], []>} : vector<2x32xbf16>, vector<32x128xbf16>, vector<2x128xf32> -> vector<2x128xf32>
    %235 = arith.addf %232, %234 : vector<2x128xf32>
    %236 = math.tanh %235 : vector<2x128xf32>
    %237 = arith.negf %235 : vector<2x128xf32>
    %238 = math.exp %237 : vector<2x128xf32>
    %cst_66 = arith.constant 1.000000e+00 : f32
    %239 = vector.broadcast %cst_66 : f32 to vector<2x128xf32>
    %240 = arith.addf %239, %238 : vector<2x128xf32>
    %241 = arith.divf %239, %240 : vector<2x128xf32>
    %242 = arith.select %13, %236, %241 : vector<2x128xi1>, vector<2x128xf32>
    %243 = vector.extract_strided_slice %242 {offsets = [0, 0], sizes = [2, 32], strides = [1, 1]} : vector<2x128xf32> to vector<2x32xf32>
    %244 = vector.extract_strided_slice %242 {offsets = [0, 32], sizes = [2, 32], strides = [1, 1]} : vector<2x128xf32> to vector<2x32xf32>
    %245 = vector.extract_strided_slice %242 {offsets = [0, 64], sizes = [2, 32], strides = [1, 1]} : vector<2x128xf32> to vector<2x32xf32>
    %246 = vector.extract_strided_slice %242 {offsets = [0, 96], sizes = [2, 32], strides = [1, 1]} : vector<2x128xf32> to vector<2x32xf32>
    %247 = arith.mulf %244, %228 : vector<2x32xf32>
    %248 = arith.mulf %243, %245 : vector<2x32xf32>
    %249 = arith.addf %247, %248 : vector<2x32xf32>
    %250 = math.tanh %249 : vector<2x32xf32>
    %251 = arith.mulf %246, %250 : vector<2x32xf32>
    %c2_67 = arith.constant 2 : index
    %c0_68 = arith.constant 0 : index
    %252 = vector.load %arg20[%c2_67, %c0_68] : memref<16x32xf32, #tpu.memory_space<vmem>>, vector<2x32xf32>
    tpu.vector_store %arg20[%c2_67, %c0_68], %251 {strides = array<i32>} : memref<16x32xf32, #tpu.memory_space<vmem>>, vector<2x32xf32>,
    %253 = vector.extract_strided_slice %205 {offsets = [4, 0], sizes = [2, 128], strides = [1, 1]} : vector<16x128xf32> to vector<2x128xf32>
    %254 = arith.truncf %251 : vector<2x32xf32> to vector<2x32xbf16>
    %cst_69 = arith.constant dense<0.000000e+00> : vector<2x128xf32>
    %255 = tpu.matmul %254, %206, %cst_69 {dimension_numbers = #tpu.dot_dimension_numbers<[1], [0], [0], [1], [0, 0, 1, 1], [], []>} : vector<2x32xbf16>, vector<32x128xbf16>, vector<2x128xf32> -> vector<2x128xf32>
    %256 = arith.addf %253, %255 : vector<2x128xf32>
    %257 = math.tanh %256 : vector<2x128xf32>
    %258 = arith.negf %256 : vector<2x128xf32>
    %259 = math.exp %258 : vector<2x128xf32>
    %cst_70 = arith.constant 1.000000e+00 : f32
    %260 = vector.broadcast %cst_70 : f32 to vector<2x128xf32>
    %261 = arith.addf %260, %259 : vector<2x128xf32>
    %262 = arith.divf %260, %261 : vector<2x128xf32>
    %263 = arith.select %13, %257, %262 : vector<2x128xi1>, vector<2x128xf32>
    %264 = vector.extract_strided_slice %263 {offsets = [0, 0], sizes = [2, 32], strides = [1, 1]} : vector<2x128xf32> to vector<2x32xf32>
    %265 = vector.extract_strided_slice %263 {offsets = [0, 32], sizes = [2, 32], strides = [1, 1]} : vector<2x128xf32> to vector<2x32xf32>
    %266 = vector.extract_strided_slice %263 {offsets = [0, 64], sizes = [2, 32], strides = [1, 1]} : vector<2x128xf32> to vector<2x32xf32>
    %267 = vector.extract_strided_slice %263 {offsets = [0, 96], sizes = [2, 32], strides = [1, 1]} : vector<2x128xf32> to vector<2x32xf32>
    %268 = arith.mulf %265, %249 : vector<2x32xf32>
    %269 = arith.mulf %264, %266 : vector<2x32xf32>
    %270 = arith.addf %268, %269 : vector<2x32xf32>
    %271 = math.tanh %270 : vector<2x32xf32>
    %272 = arith.mulf %267, %271 : vector<2x32xf32>
    %c4_71 = arith.constant 4 : index
    %c0_72 = arith.constant 0 : index
    %273 = vector.load %arg20[%c4_71, %c0_72] : memref<16x32xf32, #tpu.memory_space<vmem>>, vector<2x32xf32>
    tpu.vector_store %arg20[%c4_71, %c0_72], %272 {strides = array<i32>} : memref<16x32xf32, #tpu.memory_space<vmem>>, vector<2x32xf32>,
    %274 = vector.extract_strided_slice %205 {offsets = [6, 0], sizes = [2, 128], strides = [1, 1]} : vector<16x128xf32> to vector<2x128xf32>
    %275 = arith.truncf %272 : vector<2x32xf32> to vector<2x32xbf16>
    %cst_73 = arith.constant dense<0.000000e+00> : vector<2x128xf32>
    %276 = tpu.matmul %275, %206, %cst_73 {dimension_numbers = #tpu.dot_dimension_numbers<[1], [0], [0], [1], [0, 0, 1, 1], [], []>} : vector<2x32xbf16>, vector<32x128xbf16>, vector<2x128xf32> -> vector<2x128xf32>
    %277 = arith.addf %274, %276 : vector<2x128xf32>
    %278 = math.tanh %277 : vector<2x128xf32>
    %279 = arith.negf %277 : vector<2x128xf32>
    %280 = math.exp %279 : vector<2x128xf32>
    %cst_74 = arith.constant 1.000000e+00 : f32
    %281 = vector.broadcast %cst_74 : f32 to vector<2x128xf32>
    %282 = arith.addf %281, %280 : vector<2x128xf32>
    %283 = arith.divf %281, %282 : vector<2x128xf32>
    %284 = arith.select %13, %278, %283 : vector<2x128xi1>, vector<2x128xf32>
    %285 = vector.extract_strided_slice %284 {offsets = [0, 0], sizes = [2, 32], strides = [1, 1]} : vector<2x128xf32> to vector<2x32xf32>
    %286 = vector.extract_strided_slice %284 {offsets = [0, 32], sizes = [2, 32], strides = [1, 1]} : vector<2x128xf32> to vector<2x32xf32>
    %287 = vector.extract_strided_slice %284 {offsets = [0, 64], sizes = [2, 32], strides = [1, 1]} : vector<2x128xf32> to vector<2x32xf32>
    %288 = vector.extract_strided_slice %284 {offsets = [0, 96], sizes = [2, 32], strides = [1, 1]} : vector<2x128xf32> to vector<2x32xf32>
    %289 = arith.mulf %286, %270 : vector<2x32xf32>
    %290 = arith.mulf %285, %287 : vector<2x32xf32>
    %291 = arith.addf %289, %290 : vector<2x32xf32>
    %292 = math.tanh %291 : vector<2x32xf32>
    %293 = arith.mulf %288, %292 : vector<2x32xf32>
    %c6_75 = arith.constant 6 : index
    %c0_76 = arith.constant 0 : index
    %294 = vector.load %arg20[%c6_75, %c0_76] : memref<16x32xf32, #tpu.memory_space<vmem>>, vector<2x32xf32>
    tpu.vector_store %arg20[%c6_75, %c0_76], %293 {strides = array<i32>} : memref<16x32xf32, #tpu.memory_space<vmem>>, vector<2x32xf32>,
    %295 = vector.extract_strided_slice %205 {offsets = [8, 0], sizes = [2, 128], strides = [1, 1]} : vector<16x128xf32> to vector<2x128xf32>
    %296 = arith.truncf %293 : vector<2x32xf32> to vector<2x32xbf16>
    %cst_77 = arith.constant dense<0.000000e+00> : vector<2x128xf32>
    %297 = tpu.matmul %296, %206, %cst_77 {dimension_numbers = #tpu.dot_dimension_numbers<[1], [0], [0], [1], [0, 0, 1, 1], [], []>} : vector<2x32xbf16>, vector<32x128xbf16>, vector<2x128xf32> -> vector<2x128xf32>
    %298 = arith.addf %295, %297 : vector<2x128xf32>
    %299 = math.tanh %298 : vector<2x128xf32>
    %300 = arith.negf %298 : vector<2x128xf32>
    %301 = math.exp %300 : vector<2x128xf32>
    %cst_78 = arith.constant 1.000000e+00 : f32
    %302 = vector.broadcast %cst_78 : f32 to vector<2x128xf32>
    %303 = arith.addf %302, %301 : vector<2x128xf32>
    %304 = arith.divf %302, %303 : vector<2x128xf32>
    %305 = arith.select %13, %299, %304 : vector<2x128xi1>, vector<2x128xf32>
    %306 = vector.extract_strided_slice %305 {offsets = [0, 0], sizes = [2, 32], strides = [1, 1]} : vector<2x128xf32> to vector<2x32xf32>
    %307 = vector.extract_strided_slice %305 {offsets = [0, 32], sizes = [2, 32], strides = [1, 1]} : vector<2x128xf32> to vector<2x32xf32>
    %308 = vector.extract_strided_slice %305 {offsets = [0, 64], sizes = [2, 32], strides = [1, 1]} : vector<2x128xf32> to vector<2x32xf32>
    %309 = vector.extract_strided_slice %305 {offsets = [0, 96], sizes = [2, 32], strides = [1, 1]} : vector<2x128xf32> to vector<2x32xf32>
    %310 = arith.mulf %307, %291 : vector<2x32xf32>
    %311 = arith.mulf %306, %308 : vector<2x32xf32>
    %312 = arith.addf %310, %311 : vector<2x32xf32>
    %313 = math.tanh %312 : vector<2x32xf32>
    %314 = arith.mulf %309, %313 : vector<2x32xf32>
    %c8_79 = arith.constant 8 : index
    %c0_80 = arith.constant 0 : index
    %315 = vector.load %arg20[%c8_79, %c0_80] : memref<16x32xf32, #tpu.memory_space<vmem>>, vector<2x32xf32>
    tpu.vector_store %arg20[%c8_79, %c0_80], %314 {strides = array<i32>} : memref<16x32xf32, #tpu.memory_space<vmem>>, vector<2x32xf32>,
    %316 = vector.extract_strided_slice %205 {offsets = [10, 0], sizes = [2, 128], strides = [1, 1]} : vector<16x128xf32> to vector<2x128xf32>
    %317 = arith.truncf %314 : vector<2x32xf32> to vector<2x32xbf16>
    %cst_81 = arith.constant dense<0.000000e+00> : vector<2x128xf32>
    %318 = tpu.matmul %317, %206, %cst_81 {dimension_numbers = #tpu.dot_dimension_numbers<[1], [0], [0], [1], [0, 0, 1, 1], [], []>} : vector<2x32xbf16>, vector<32x128xbf16>, vector<2x128xf32> -> vector<2x128xf32>
    %319 = arith.addf %316, %318 : vector<2x128xf32>
    %320 = math.tanh %319 : vector<2x128xf32>
    %321 = arith.negf %319 : vector<2x128xf32>
    %322 = math.exp %321 : vector<2x128xf32>
    %cst_82 = arith.constant 1.000000e+00 : f32
    %323 = vector.broadcast %cst_82 : f32 to vector<2x128xf32>
    %324 = arith.addf %323, %322 : vector<2x128xf32>
    %325 = arith.divf %323, %324 : vector<2x128xf32>
    %326 = arith.select %13, %320, %325 : vector<2x128xi1>, vector<2x128xf32>
    %327 = vector.extract_strided_slice %326 {offsets = [0, 0], sizes = [2, 32], strides = [1, 1]} : vector<2x128xf32> to vector<2x32xf32>
    %328 = vector.extract_strided_slice %326 {offsets = [0, 32], sizes = [2, 32], strides = [1, 1]} : vector<2x128xf32> to vector<2x32xf32>
    %329 = vector.extract_strided_slice %326 {offsets = [0, 64], sizes = [2, 32], strides = [1, 1]} : vector<2x128xf32> to vector<2x32xf32>
    %330 = vector.extract_strided_slice %326 {offsets = [0, 96], sizes = [2, 32], strides = [1, 1]} : vector<2x128xf32> to vector<2x32xf32>
    %331 = arith.mulf %328, %312 : vector<2x32xf32>
    %332 = arith.mulf %327, %329 : vector<2x32xf32>
    %333 = arith.addf %331, %332 : vector<2x32xf32>
    %334 = math.tanh %333 : vector<2x32xf32>
    %335 = arith.mulf %330, %334 : vector<2x32xf32>
    %c10_83 = arith.constant 10 : index
    %c0_84 = arith.constant 0 : index
    %336 = vector.load %arg20[%c10_83, %c0_84] : memref<16x32xf32, #tpu.memory_space<vmem>>, vector<2x32xf32>
    tpu.vector_store %arg20[%c10_83, %c0_84], %335 {strides = array<i32>} : memref<16x32xf32, #tpu.memory_space<vmem>>, vector<2x32xf32>,
    %337 = vector.extract_strided_slice %205 {offsets = [12, 0], sizes = [2, 128], strides = [1, 1]} : vector<16x128xf32> to vector<2x128xf32>
    %338 = arith.truncf %335 : vector<2x32xf32> to vector<2x32xbf16>
    %cst_85 = arith.constant dense<0.000000e+00> : vector<2x128xf32>
    %339 = tpu.matmul %338, %206, %cst_85 {dimension_numbers = #tpu.dot_dimension_numbers<[1], [0], [0], [1], [0, 0, 1, 1], [], []>} : vector<2x32xbf16>, vector<32x128xbf16>, vector<2x128xf32> -> vector<2x128xf32>
    %340 = arith.addf %337, %339 : vector<2x128xf32>
    %341 = math.tanh %340 : vector<2x128xf32>
    %342 = arith.negf %340 : vector<2x128xf32>
    %343 = math.exp %342 : vector<2x128xf32>
    %cst_86 = arith.constant 1.000000e+00 : f32
    %344 = vector.broadcast %cst_86 : f32 to vector<2x128xf32>
    %345 = arith.addf %344, %343 : vector<2x128xf32>
    %346 = arith.divf %344, %345 : vector<2x128xf32>
    %347 = arith.select %13, %341, %346 : vector<2x128xi1>, vector<2x128xf32>
    %348 = vector.extract_strided_slice %347 {offsets = [0, 0], sizes = [2, 32], strides = [1, 1]} : vector<2x128xf32> to vector<2x32xf32>
    %349 = vector.extract_strided_slice %347 {offsets = [0, 32], sizes = [2, 32], strides = [1, 1]} : vector<2x128xf32> to vector<2x32xf32>
    %350 = vector.extract_strided_slice %347 {offsets = [0, 64], sizes = [2, 32], strides = [1, 1]} : vector<2x128xf32> to vector<2x32xf32>
    %351 = vector.extract_strided_slice %347 {offsets = [0, 96], sizes = [2, 32], strides = [1, 1]} : vector<2x128xf32> to vector<2x32xf32>
    %352 = arith.mulf %349, %333 : vector<2x32xf32>
    %353 = arith.mulf %348, %350 : vector<2x32xf32>
    %354 = arith.addf %352, %353 : vector<2x32xf32>
    %355 = math.tanh %354 : vector<2x32xf32>
    %356 = arith.mulf %351, %355 : vector<2x32xf32>
    %c12_87 = arith.constant 12 : index
    %c0_88 = arith.constant 0 : index
    %357 = vector.load %arg20[%c12_87, %c0_88] : memref<16x32xf32, #tpu.memory_space<vmem>>, vector<2x32xf32>
    tpu.vector_store %arg20[%c12_87, %c0_88], %356 {strides = array<i32>} : memref<16x32xf32, #tpu.memory_space<vmem>>, vector<2x32xf32>,
    %358 = vector.extract_strided_slice %205 {offsets = [14, 0], sizes = [2, 128], strides = [1, 1]} : vector<16x128xf32> to vector<2x128xf32>
    %359 = arith.truncf %356 : vector<2x32xf32> to vector<2x32xbf16>
    %cst_89 = arith.constant dense<0.000000e+00> : vector<2x128xf32>
    %360 = tpu.matmul %359, %206, %cst_89 {dimension_numbers = #tpu.dot_dimension_numbers<[1], [0], [0], [1], [0, 0, 1, 1], [], []>} : vector<2x32xbf16>, vector<32x128xbf16>, vector<2x128xf32> -> vector<2x128xf32>
    %361 = arith.addf %358, %360 : vector<2x128xf32>
    %362 = math.tanh %361 : vector<2x128xf32>
    %363 = arith.negf %361 : vector<2x128xf32>
    %364 = math.exp %363 : vector<2x128xf32>
    %cst_90 = arith.constant 1.000000e+00 : f32
    %365 = vector.broadcast %cst_90 : f32 to vector<2x128xf32>
    %366 = arith.addf %365, %364 : vector<2x128xf32>
    %367 = arith.divf %365, %366 : vector<2x128xf32>
    %368 = arith.select %13, %362, %367 : vector<2x128xi1>, vector<2x128xf32>
    %369 = vector.extract_strided_slice %368 {offsets = [0, 0], sizes = [2, 32], strides = [1, 1]} : vector<2x128xf32> to vector<2x32xf32>
    %370 = vector.extract_strided_slice %368 {offsets = [0, 32], sizes = [2, 32], strides = [1, 1]} : vector<2x128xf32> to vector<2x32xf32>
    %371 = vector.extract_strided_slice %368 {offsets = [0, 64], sizes = [2, 32], strides = [1, 1]} : vector<2x128xf32> to vector<2x32xf32>
    %372 = vector.extract_strided_slice %368 {offsets = [0, 96], sizes = [2, 32], strides = [1, 1]} : vector<2x128xf32> to vector<2x32xf32>
    %373 = arith.mulf %370, %354 : vector<2x32xf32>
    %374 = arith.mulf %369, %371 : vector<2x32xf32>
    %375 = arith.addf %373, %374 : vector<2x32xf32>
    %376 = math.tanh %375 : vector<2x32xf32>
    %377 = arith.mulf %372, %376 : vector<2x32xf32>
    %c14_91 = arith.constant 14 : index
    %c0_92 = arith.constant 0 : index
    %378 = vector.load %arg20[%c14_91, %c0_92] : memref<16x32xf32, #tpu.memory_space<vmem>>, vector<2x32xf32>
    tpu.vector_store %arg20[%c14_91, %c0_92], %377 {strides = array<i32>} : memref<16x32xf32, #tpu.memory_space<vmem>>, vector<2x32xf32>,
    %c1_93 = arith.constant 1 : index
    %c0_94 = arith.constant 0 : index
    %c0_95 = arith.constant 0 : index
    %379 = vector.load %arg18[%c1_93, %c0_94, %c0_95] : memref<2x2x32xf32, #tpu.memory_space<vmem>>, vector<1x2x32xf32>
    %380 = vector.shape_cast %379 : vector<1x2x32xf32> to vector<2x32xf32>
    %381 = vector.shape_cast %377 : vector<2x32xf32> to vector<1x2x32xf32>
    tpu.vector_store %arg18[%c1_93, %c0_94, %c0_95], %381 {strides = array<i32>} : memref<2x2x32xf32, #tpu.memory_space<vmem>>, vector<1x2x32xf32>,
    %c1_96 = arith.constant 1 : index
    %c0_97 = arith.constant 0 : index
    %c0_98 = arith.constant 0 : index
    %382 = vector.load %arg19[%c1_96, %c0_97, %c0_98] : memref<2x2x32xf32, #tpu.memory_space<vmem>>, vector<1x2x32xf32>
    %383 = vector.shape_cast %382 : vector<1x2x32xf32> to vector<2x32xf32>
    %384 = vector.shape_cast %375 : vector<2x32xf32> to vector<1x2x32xf32>
    tpu.vector_store %arg19[%c1_96, %c0_97, %c0_98], %384 {strides = array<i32>} : memref<2x2x32xf32, #tpu.memory_space<vmem>>, vector<1x2x32xf32>,
    %c0_99 = arith.constant 0 : index
    %c0_100 = arith.constant 0 : index
    %385 = vector.load %arg20[%c0_99, %c0_100] : memref<16x32xf32, #tpu.memory_space<vmem>>, vector<16x32xf32>
    %386 = arith.truncf %385 : vector<16x32xf32> to vector<16x32xbf16>
    %c0_101 = arith.constant 0 : index
    %c0_102 = arith.constant 0 : index
    %387 = vector.load %arg11[%c0_101, %c0_102] : memref<32x8xbf16, #tpu.memory_space<vmem>>, vector<32x8xbf16>
    %cst_103 = arith.constant dense<0.000000e+00> : vector<16x8xf32>
    %388 = tpu.matmul %386, %387, %cst_103 {dimension_numbers = #tpu.dot_dimension_numbers<[1], [0], [0], [1], [0, 0, 1, 1], [], []>} : vector<16x32xbf16>, vector<32x8xbf16>, vector<16x8xf32> -> vector<16x8xf32>
    %c0_104 = arith.constant 0 : index
    %c0_105 = arith.constant 0 : index
    %389 = vector.load %arg12[%c0_104, %c0_105] : memref<1x8xf32, #tpu.memory_space<vmem>>, vector<1x8xf32>
    %390 = vector.broadcast %389 : vector<1x8xf32> to vector<16x8xf32>
    %391 = arith.addf %388, %390 : vector<16x8xf32>
    %cst_106 = arith.constant 5.000000e-01 : f32
    %392 = vector.broadcast %cst_106 : f32 to vector<16x8xf32>
    %393 = arith.mulf %392, %391 : vector<16x8xf32>
    %cst_107 = arith.constant 0.707106769 : f32
    %394 = vector.broadcast %cst_107 : f32 to vector<16x8xf32>
    %395 = arith.mulf %391, %394 : vector<16x8xf32>
    %396 = math.erf %395 : vector<16x8xf32>
    %cst_108 = arith.constant 1.000000e+00 : f32
    %397 = vector.broadcast %cst_108 : f32 to vector<16x8xf32>
    %398 = arith.addf %397, %396 : vector<16x8xf32>
    %399 = arith.mulf %393, %398 : vector<16x8xf32>
    %400 = arith.truncf %399 : vector<16x8xf32> to vector<16x8xbf16>
    %c0_109 = arith.constant 0 : index
    %c0_110 = arith.constant 0 : index
    %401 = vector.load %arg13[%c0_109, %c0_110] : memref<8x2xbf16, #tpu.memory_space<vmem>>, vector<8x2xbf16>
    %cst_111 = arith.constant dense<0.000000e+00> : vector<16x2xf32>
    %402 = tpu.matmul %400, %401, %cst_111 {dimension_numbers = #tpu.dot_dimension_numbers<[1], [0], [0], [1], [0, 0, 1, 1], [], []>} : vector<16x8xbf16>, vector<8x2xbf16>, vector<16x2xf32> -> vector<16x2xf32>
    %c0_112 = arith.constant 0 : index
    %c0_113 = arith.constant 0 : index
    %403 = vector.load %arg14[%c0_112, %c0_113] : memref<1x2xf32, #tpu.memory_space<vmem>>, vector<1x2xf32>
    %404 = vector.broadcast %403 : vector<1x2xf32> to vector<16x2xf32>
    %405 = arith.addf %402, %404 : vector<16x2xf32>
    %cst_114 = arith.constant 5.000000e-01 : f32
    %406 = vector.broadcast %cst_114 : f32 to vector<16x2xf32>
    %407 = arith.mulf %406, %405 : vector<16x2xf32>
    %cst_115 = arith.constant 0.707106769 : f32
    %408 = vector.broadcast %cst_115 : f32 to vector<16x2xf32>
    %409 = arith.mulf %405, %408 : vector<16x2xf32>
    %410 = math.erf %409 : vector<16x2xf32>
    %cst_116 = arith.constant 1.000000e+00 : f32
    %411 = vector.broadcast %cst_116 : f32 to vector<16x2xf32>
    %412 = arith.addf %411, %410 : vector<16x2xf32>
    %413 = arith.mulf %407, %412 : vector<16x2xf32>
    %414 = arith.truncf %413 : vector<16x2xf32> to vector<16x2xbf16>
    %c0_117 = arith.constant 0 : index
    %c0_118 = arith.constant 0 : index
    %415 = vector.load %arg15[%c0_117, %c0_118] : memref<2x8xbf16, #tpu.memory_space<vmem>>, vector<2x8xbf16>
    %cst_119 = arith.constant dense<0.000000e+00> : vector<16x8xf32>
    %416 = tpu.matmul %414, %415, %cst_119 {dimension_numbers = #tpu.dot_dimension_numbers<[1], [0], [0], [1], [0, 0, 1, 1], [], []>} : vector<16x2xbf16>, vector<2x8xbf16>, vector<16x8xf32> -> vector<16x8xf32>
    %c0_120 = arith.constant 0 : index
    %c0_121 = arith.constant 0 : index
    %417 = vector.load %arg16[%c0_120, %c0_121] : memref<1x8xf32, #tpu.memory_space<vmem>>, vector<1x8xf32>
    %418 = vector.broadcast %417 : vector<1x8xf32> to vector<16x8xf32>
    %419 = arith.addf %416, %418 : vector<16x8xf32>
    %c0_122 = arith.constant 0 : index
    %c0_123 = arith.constant 0 : index
    %420 = vector.load %arg17[%c0_122, %c0_123] : memref<16x8xf32, #tpu.memory_space<vmem>>, vector<16x8xf32>
    tpu.vector_store %arg17[%c0_122, %c0_123], %419 {strides = array<i32>} : memref<16x8xf32, #tpu.memory_space<vmem>>, vector<16x8xf32>,
    return
  }
  func.func @transform_0(%arg0: i32) -> (i32, i32) {
    %c0_i32 = arith.constant 0 : i32
    %c0_i32_0 = arith.constant 0 : i32
    %c0_i32_1 = arith.constant 0 : i32
    return %c0_i32, %c0_i32_0 : i32, i32
  }
  func.func @transform_1(%arg0: i32) -> (i32, i32) {
    %c0_i32 = arith.constant 0 : i32
    %c0_i32_0 = arith.constant 0 : i32
    %c0_i32_1 = arith.constant 0 : i32
    return %c0_i32, %c0_i32_0 : i32, i32
  }
  func.func @transform_2(%arg0: i32) -> (i32, i32) {
    %c0_i32 = arith.constant 0 : i32
    %c0_i32_0 = arith.constant 0 : i32
    %c0_i32_1 = arith.constant 0 : i32
    return %c0_i32, %c0_i32_0 : i32, i32
  }
  func.func @transform_3(%arg0: i32) -> (i32, i32) {
    %c0_i32 = arith.constant 0 : i32
    %c0_i32_0 = arith.constant 0 : i32
    %c0_i32_1 = arith.constant 0 : i32
    return %c0_i32, %c0_i32_0 : i32, i32
  }
  func.func @transform_4(%arg0: i32) -> (i32, i32) {
    %c0_i32 = arith.constant 0 : i32
    %c0_i32_0 = arith.constant 0 : i32
    %c0_i32_1 = arith.constant 0 : i32
    return %c0_i32, %c0_i32_0 : i32, i32
  }
  func.func @transform_5(%arg0: i32) -> (i32, i32) {
    %c0_i32 = arith.constant 0 : i32
    %c0_i32_0 = arith.constant 0 : i32
    %c0_i32_1 = arith.constant 0 : i32
    return %c0_i32, %c0_i32_0 : i32, i32
  }
  func.func @transform_6(%arg0: i32) -> (i32, i32) {
    %c0_i32 = arith.constant 0 : i32
    %c0_i32_0 = arith.constant 0 : i32
    %c0_i32_1 = arith.constant 0 : i32
    return %c0_i32, %c0_i32_0 : i32, i32
  }
  func.func @transform_7(%arg0: i32) -> (i32, i32) {
    %c0_i32 = arith.constant 0 : i32
    %c0_i32_0 = arith.constant 0 : i32
    %c0_i32_1 = arith.constant 0 : i32
    return %c0_i32, %c0_i32_0 : i32, i32
  }
  func.func @transform_8(%arg0: i32) -> (i32, i32, i32) {
    %c0_i32 = arith.constant 0 : i32
    %c0_i32_0 = arith.constant 0 : i32
    %c0_i32_1 = arith.constant 0 : i32
    %c0_i32_2 = arith.constant 0 : i32
    return %c0_i32, %c0_i32_0, %c0_i32_1 : i32, i32, i32
  }
  func.func @transform_9(%arg0: i32) -> (i32, i32, i32) {
    %c0_i32 = arith.constant 0 : i32
    %c0_i32_0 = arith.constant 0 : i32
    %c0_i32_1 = arith.constant 0 : i32
    %c0_i32_2 = arith.constant 0 : i32
    return %c0_i32, %c0_i32_0, %c0_i32_1 : i32, i32, i32
  }
  func.func @transform_10(%arg0: i32) -> (i32, i32) {
    %c0_i32 = arith.constant 0 : i32
    %c0_i32_0 = arith.constant 0 : i32
    %c0_i32_1 = arith.constant 0 : i32
    return %c0_i32, %c0_i32_0 : i32, i32
  }
  func.func @transform_11(%arg0: i32) -> (i32, i32) {
    %c0_i32 = arith.constant 0 : i32
    %c0_i32_0 = arith.constant 0 : i32
    %c0_i32_1 = arith.constant 0 : i32
    return %c0_i32, %c0_i32_0 : i32, i32
  }
  func.func @transform_12(%arg0: i32) -> (i32, i32) {
    %c0_i32 = arith.constant 0 : i32
    %c0_i32_0 = arith.constant 0 : i32
    %c0_i32_1 = arith.constant 0 : i32
    return %c0_i32, %c0_i32_0 : i32, i32
  }
  func.func @transform_13(%arg0: i32) -> (i32, i32) {
    %c0_i32 = arith.constant 0 : i32
    %c0_i32_0 = arith.constant 0 : i32
    %c0_i32_1 = arith.constant 0 : i32
    return %c0_i32, %c0_i32_0 : i32, i32
  }
  func.func @transform_14(%arg0: i32) -> (i32, i32) {
    %c0_i32 = arith.constant 0 : i32
    %c0_i32_0 = arith.constant 0 : i32
    %c0_i32_1 = arith.constant 0 : i32
    return %c0_i32, %c0_i32_0 : i32, i32
  }
  func.func @transform_15(%arg0: i32) -> (i32, i32) {
    %c0_i32 = arith.constant 0 : i32
    %c0_i32_0 = arith.constant 0 : i32
    %c0_i32_1 = arith.constant 0 : i32
    return %c0_i32, %c0_i32_0 : i32, i32
  }
  func.func @transform_16(%arg0: i32) -> (i32, i32) {
    %c0_i32 = arith.constant 0 : i32
    %c0_i32_0 = arith.constant 0 : i32
    %c0_i32_1 = arith.constant 0 : i32
    return %c0_i32, %c0_i32_0 : i32, i32
  }
  func.func @transform_17(%arg0: i32) -> (i32, i32, i32) {
    %c0_i32 = arith.constant 0 : i32
    %c0_i32_0 = arith.constant 0 : i32
    %c0_i32_1 = arith.constant 0 : i32
    %c0_i32_2 = arith.constant 0 : i32
    return %c0_i32, %c0_i32_0, %c0_i32_1 : i32, i32, i32
  }
  func.func @transform_18(%arg0: i32) -> (i32, i32, i32) {
    %c0_i32 = arith.constant 0 : i32
    %c0_i32_0 = arith.constant 0 : i32
    %c0_i32_1 = arith.constant 0 : i32
    %c0_i32_2 = arith.constant 0 : i32
    return %c0_i32, %c0_i32_0, %c0_i32_1 : i32, i32, i32
  }
}

</mosaic_0001>

<llo_original>
// kernel: char_lstm_forward.1
$region0: #{char_lstm_forward.1}
  #allocation0 [shape = 'u32[]', space=smem, size = 0x4, offset = 0x4, fixed_abs, tag = 'smem constant byte address 0x4 - core index']
  #allocation1 [shape = 'u32[144,128]{1,0:T(1,128)}', space=vmem, size = 0x12000, scoped, tag = 'internal scratch']
  #allocation2 [shape = 'f32[16,32]{1,0:T(8,128)}', space=vmem, size = 0x2000, scoped, tag = 'scratch operand']
  %s0 = inlined_call_operand.vmem [shape: s32[16,1], index: 0, kind: input, shape index: {}]
  %s1 = inlined_call_operand.vmem [shape: f32[64,16], index: 1, kind: input, shape index: {}]
  %s2 = inlined_call_operand.vmem [shape: bf16[16,128], index: 2, kind: input, shape index: {}]
  %s3 = inlined_call_operand.vmem [shape: bf16[32,128], index: 3, kind: input, shape index: {}]
  %s4 = inlined_call_operand.vmem [shape: f32[1,128], index: 4, kind: input, shape index: {}]
  %s5 = inlined_call_operand.vmem [shape: bf16[32,128], index: 5, kind: input, shape index: {}]
  %s6 = inlined_call_operand.vmem [shape: bf16[32,128], index: 6, kind: input, shape index: {}]
  %s7 = inlined_call_operand.vmem [shape: f32[1,128], index: 7, kind: input, shape index: {}]
  %s8 = inlined_call_operand.vmem [shape: f32[2,2,32], index: 8, kind: input, shape index: {}]
  %s9 = inlined_call_operand.vmem [shape: f32[2,2,32], index: 9, kind: input, shape index: {}]
  %s10 = inlined_call_operand.vmem [shape: bf16[32,8], index: 10, kind: input, shape index: {}]
  %s11 = inlined_call_operand.vmem [shape: f32[1,8], index: 11, kind: input, shape index: {}]
  %s12 = inlined_call_operand.vmem [shape: bf16[8,2], index: 12, kind: input, shape index: {}]
  %s13 = inlined_call_operand.vmem [shape: f32[1,2], index: 13, kind: input, shape index: {}]
  %s14 = inlined_call_operand.vmem [shape: bf16[2,8], index: 14, kind: input, shape index: {}]
  %s15 = inlined_call_operand.vmem [shape: f32[1,8], index: 15, kind: input, shape index: {}]
  %s16 = inlined_call_operand.vmem [shape: f32[16,8], index: 16, kind: output, shape index: {0}]
  %s17 = inlined_call_operand.hbm [shape: f32[2,2,32], index: 17, kind: output, shape index: {1}]
  %s18 = inlined_call_operand.hbm [shape: f32[2,2,32], index: 18, kind: output, shape index: {2}]
  %19 = xla_tuple %s16, %s17, %s18
  %s20 = sld [smem:[#allocation0]]
  $region90: #{char_lstm_forward.1} parent=0
    _
  %s22 = ssub.s32 1, %s20
  %s23 = scalar_select 0, %s22, %s20
  $region1: #{char_lstm_forward.1} parent=0
    #allocation3 [shape = 'u8[2048]{0}', space=vmem, size = 0x800, scoped, tag = 'output window, operand 1, single buffered']
    #allocation4 [shape = 's32[1]{0}', space=sflag, size = 0x4, scoped, tag = 'scoped memory for char_lstm_forward.1']
    #allocation5 [shape = 'u8[2048]{0}', space=vmem, size = 0x800, scoped, tag = 'output window, operand 2, single buffered']
    #allocation6 [shape = 's32[1]{0}', space=sflag, size = 0x4, scoped, tag = 'scoped memory for char_lstm_forward.1']
    %24 = vsyncpa [#allocation4], 0
    %25 = vsyncpa [#allocation6], 0
    // Predicated region
    $region2: #{char_lstm_forward.1} parent=1 // pred_check
      _
    $region3: #{char_lstm_forward.1} parent=1 // pred_check_branch
      %27 = sbr.rel (0) target = $region5
    $region4: #{char_lstm_forward.1} parent=1 // pred_region
      _
    $region5: #{char_lstm_forward.1} parent=1 // pred_fallthru
      _
    // Predicated region
    $region6: #{char_lstm_forward.1} parent=1 // pred_check
      _
    $region7: #{char_lstm_forward.1} parent=1 // pred_check_branch
      %29 = sbr.rel (0) target = $region9
    $region8: #{char_lstm_forward.1} parent=1 // pred_region
      _
    $region9: #{char_lstm_forward.1} parent=1 // pred_fallthru
      _
    // Predicated region
    $region10: #{char_lstm_forward.1} parent=1 // pred_check
      _
    $region11: #{char_lstm_forward.1} parent=1 // pred_check_branch
      %31 = sbr.rel (0) target = $region13
    $region12: #{char_lstm_forward.1} parent=1 // pred_region
      _
    $region13: #{char_lstm_forward.1} parent=1 // pred_fallthru
      _
    // Predicated region
    $region14: #{char_lstm_forward.1} parent=1 // pred_check
      _
    $region15: #{char_lstm_forward.1} parent=1 // pred_check_branch
      %33 = sbr.rel (0) target = $region17
    $region16: #{char_lstm_forward.1} parent=1 // pred_region
      _
    $region17: #{char_lstm_forward.1} parent=1 // pred_fallthru
      _
    // Predicated region
    $region18: #{char_lstm_forward.1} parent=1 // pred_check
      _
    $region19: #{char_lstm_forward.1} parent=1 // pred_check_branch
      %35 = sbr.rel (0) target = $region21
    $region20: #{char_lstm_forward.1} parent=1 // pred_region
      _
    $region21: #{char_lstm_forward.1} parent=1 // pred_fallthru
      _
    // Predicated region
    $region22: #{char_lstm_forward.1} parent=1 // pred_check
      _
    $region23: #{char_lstm_forward.1} parent=1 // pred_check_branch
      %37 = sbr.rel (0) target = $region25
    $region24: #{char_lstm_forward.1} parent=1 // pred_region
      _
    $region25: #{char_lstm_forward.1} parent=1 // pred_fallthru
      _
    // Predicated region
    $region26: #{char_lstm_forward.1} parent=1 // pred_check
      _
    $region27: #{char_lstm_forward.1} parent=1 // pred_check_branch
      %39 = sbr.rel (0) target = $region29
    $region28: #{char_lstm_forward.1} parent=1 // pred_region
      _
    $region29: #{char_lstm_forward.1} parent=1 // pred_fallthru
      _
    // Predicated region
    $region30: #{char_lstm_forward.1} parent=1 // pred_check
      _
    $region31: #{char_lstm_forward.1} parent=1 // pred_check_branch
      %41 = sbr.rel (0) target = $region33
    $region32: #{char_lstm_forward.1} parent=1 // pred_region
      _
    $region33: #{char_lstm_forward.1} parent=1 // pred_fallthru
      _
    // Predicated region
    $region34: #{char_lstm_forward.1} parent=1 // pred_check
      _
    $region35: #{char_lstm_forward.1} parent=1 // pred_check_branch
      %43 = sbr.rel (0) target = $region37
    $region36: #{char_lstm_forward.1} parent=1 // pred_region
      _
    $region37: #{char_lstm_forward.1} parent=1 // pred_fallthru
      _
    // Predicated region
    $region38: #{char_lstm_forward.1} parent=1 // pred_check
      _
    $region39: #{char_lstm_forward.1} parent=1 // pred_check_branch
      %45 = sbr.rel (0) target = $region41
    $region40: #{char_lstm_forward.1} parent=1 // pred_region
      _
    $region41: #{char_lstm_forward.1} parent=1 // pred_fallthru
      _
    // Predicated region
    $region42: #{char_lstm_forward.1} parent=1 // pred_check
      _
    $region43: #{char_lstm_forward.1} parent=1 // pred_check_branch
      %47 = sbr.rel (0) target = $region45
    $region44: #{char_lstm_forward.1} parent=1 // pred_region
      _
    $region45: #{char_lstm_forward.1} parent=1 // pred_fallthru
      _
    // Predicated region
    $region46: #{char_lstm_forward.1} parent=1 // pred_check
      _
    $region47: #{char_lstm_forward.1} parent=1 // pred_check_branch
      %49 = sbr.rel (0) target = $region49
    $region48: #{char_lstm_forward.1} parent=1 // pred_region
      _
    $region49: #{char_lstm_forward.1} parent=1 // pred_fallthru
      _
    // Predicated region
    $region50: #{char_lstm_forward.1} parent=1 // pred_check
      _
    $region51: #{char_lstm_forward.1} parent=1 // pred_check_branch
      %51 = sbr.rel (0) target = $region53
    $region52: #{char_lstm_forward.1} parent=1 // pred_region
      _
    $region53: #{char_lstm_forward.1} parent=1 // pred_fallthru
      _
    // Predicated region
    $region54: #{char_lstm_forward.1} parent=1 // pred_check
      _
    $region55: #{char_lstm_forward.1} parent=1 // pred_check_branch
      %53 = sbr.rel (0) target = $region57
    $region56: #{char_lstm_forward.1} parent=1 // pred_region
      _
    $region57: #{char_lstm_forward.1} parent=1 // pred_fallthru
      _
    // Predicated region
    $region58: #{char_lstm_forward.1} parent=1 // pred_check
      _
    $region59: #{char_lstm_forward.1} parent=1 // pred_check_branch
      %55 = sbr.rel (0) target = $region61
    $region60: #{char_lstm_forward.1} parent=1 // pred_region
      _
    $region61: #{char_lstm_forward.1} parent=1 // pred_fallthru
      _
    // Predicated region
    $region62: #{char_lstm_forward.1} parent=1 // pred_check
      _
    $region63: #{char_lstm_forward.1} parent=1 // pred_check_branch
      %57 = sbr.rel (0) target = $region65
    $region64: #{char_lstm_forward.1} parent=1 // pred_region
      _
    $region65: #{char_lstm_forward.1} parent=1 // pred_fallthru
      _
    %v59 = vld [vmem:[%s0] sm:$0xff]
    %v60 = vld [vmem:[%s0 + $0x8] sm:$0xff]
    %v61 = vlaneseq
    %v62 = vand.u32 %v61, 127
    %63 = vset.pattern.permute.xlu0 0
    %64 = vperm.xlu0 %63, %v59
    %v65 = vpop.permute.xlu0 %64
    %66 = vset.pattern.permute.xlu0 0
    %67 = vperm.xlu0 %66, %v60
    %v68 = vpop.permute.xlu0 %67
    %vm69 = vcmp.eq.s32.totalorder %v62, %v65
    %vm70 = vcmp.eq.s32.totalorder %v62, %v68
    %v71 = vsel %vm69, 1, 0
    %v72 = vsel %vm70, 1, 0
    %v73 = vcvt.s32.f32 %v71
    %v74 = vcvt.s32.f32 %v72
    %v75 = vld [vmem:[%s1] sm:$0xff]
    %v76 = vld [vmem:[%s1 + $0x8] sm:$0xff]
    %v77 = vld [vmem:[%s1 + $0x10] sm:$0xff]
    %v78 = vld [vmem:[%s1 + $0x18] sm:$0xff]
    %v79 = vld [vmem:[%s1 + $0x20] sm:$0xff]
    %v80 = vld [vmem:[%s1 + $0x28] sm:$0xff]
    %v81 = vld [vmem:[%s1 + $0x30] sm:$0xff]
    %v82 = vld [vmem:[%s1 + $0x38] sm:$0xff]
    %vm83 = vcmask 523264
    %v85 = vsel %vm83, %v73, 0
    %v88 = vsel %vm83, %v74, 0
    %90 = vmatprep.subr.mxu0 0.0
    %91 = vmatpush1.msra.mxu0 %v75
    %92 = vmatprep.subr.mxu0 0.0
    %93 = vmatpush1.msra.mxu0 %v76
    %94 = vmatprep.subr.mxu0 0.0
    %95 = vmatpush1.msra.mxu0 %v77
    %96 = vmatprep.subr.mxu0 0.0
    %97 = vmatpush1.msra.mxu0 %v78
    %98 = vmatprep.subr.mxu0 0.0
    %99 = vmatpush1.msra.mxu0 %v79
    %100 = vmatprep.subr.mxu0 0.0
    %101 = vmatpush1.msra.mxu0 %v80
    %102 = vmatprep.subr.mxu0 0.0
    %103 = vmatpush1.msra.mxu0 %v81
    %104 = vmatprep.subr.mxu0 0.0
    %105 = vmatpush1.msra.mxu0 %v82
    %106 = vmatprep.subr.mxu0 0.0
    %107 = vmatpush1.msra.mxu0 0.0
    %108 = vmatprep.subr.mxu0 0.0
    %109 = vmatpush1.msra.mxu0 0.0
    %110 = vmatprep.subr.mxu0 0.0
    %111 = vmatpush1.msra.mxu0 0.0
    %112 = vmatprep.subr.mxu0 0.0
    %113 = vmatpush1.msra.mxu0 0.0
    %114 = vmatprep.subr.mxu0 0.0
    %115 = vmatpush1.msra.mxu0 0.0
    %116 = vmatprep.subr.mxu0 0.0
    %117 = vmatpush1.msra.mxu0 0.0
    %118 = vmatprep.subr.mxu0 0.0
    %119 = vmatpush1.msra.mxu0 0.0
    %120 = vmatprep.subr.mxu0 0.0
    %121 = vmatpush1.msra.mxu0 0.0
    %122 = vmatprep.subr.mxu0 0.0
    %123 = vmatpush1.msra.mxu0 0.0
    %124 = vmatprep.subr.mxu0 0.0
    %125 = vmatpush1.msra.mxu0 0.0
    %126 = vmatprep.subr.mxu0 0.0
    %127 = vmatpush1.msra.mxu0 0.0
    %128 = vmatprep.subr.mxu0 0.0
    %129 = vmatpush1.msra.mxu0 0.0
    %130 = vmatprep.subr.mxu0 0.0
    %131 = vmatpush1.msra.mxu0 0.0
    %132 = vmatprep.subr.mxu0 0.0
    %133 = vmatpush1.msra.mxu0 0.0
    %134 = vmatprep.subr.mxu0 0.0
    %135 = vmatpush1.msra.mxu0 0.0
    %136 = vmatprep.subr.mxu0 0.0
    %137 = vmatpush1.msra.mxu0 0.0
    %138 = vmatprep.subr.mxu0 0.0
    %139 = vmatpush1.msra.mxu0 0.0
    %140 = vmatprep.subr.mxu0 0.0
    %141 = vmatpush1.msra.mxu0 0.0
    %142 = vmatprep.subr.mxu0 0.0
    %143 = vmatpush1.msra.mxu0 0.0
    %144 = vmatprep.subr.mxu0 0.0
    %145 = vmatpush1.msra.mxu0 0.0
    %146 = vmatprep.subr.mxu0 0.0
    %147 = vmatpush1.msra.mxu0 0.0
    %148 = vmatprep.subr.mxu0 0.0
    %149 = vmatpush1.msra.mxu0 0.0
    %150 = vmatprep.subr.mxu0 0.0
    %151 = vmatpush1.msra.mxu0 0.0
    %152 = vmatprep.subr.mxu0 0.0
    %153 = vmatpush1.msra.mxu0 0.0
    %154 = vmatprep.mubr.f32.mxu0 0.0
    %155 = vmatmul.mubr.f32.gmra.mrb[0].mxu0 %v85
    %v156 = vpop.f32.mrb[0].mxu0
    %v157 = vadd.f32 0.0, %v156
    %v158 = vpop.f32.mrb[0].mxu0
    %159 = vmatprep.mubr.f32.mxu0 0.0
    %160 = vmatmul.mubr.f32.gmra.mrb[0].mxu0 %v88
    %v161 = vpop.f32.mrb[0].mxu0
    %v162 = vadd.f32 0.0, %v161
    %v163 = vpop.f32.mrb[0].mxu0
    %164 = vdwg.mxu0
    %vm165 = vcmp.ge.s32.totalorder %v62, 64
    %vm166 = vcmp.lt.s32.totalorder %v62, 96
    %vm167 = vmand %vm165, %vm166
    %v168 = vpack.c.bf16 %v162, %v157
    %v169 = vld [vmem:[%s2] sm:$0xf]
    %v170 = vld [vmem:[%s2 + $0x4] sm:$0xf]
    %v171 = vld [vmem:[%s4] sm:$0x1]
    %v173 = vlaneseq
    %v174 = vshrl.u32 %v173, 7
    %v175 = vsub.s32 0, %v174
    %v176 = vrot.slane %v171, %v175
    %v180 = vunpack.c.l.b16 %v169
    %v181 = vunpack.c.l.b16 %v170
    %v182 = vpack.c.b16 %v181, %v180
    %vm184 = vcmask 130048
    %v186 = vsel %vm184, %v168, 0
    %188 = vmatprep.subr.bf16.mxu0 0
    %189 = vmatpush1.bf16.msra.mxu0 %v182
    %190 = vmatprep.subr.bf16.mxu0 0
    %191 = vmatpush1.bf16.msra.mxu0 0
    %192 = vmatprep.subr.bf16.mxu0 0
    %193 = vmatpush1.bf16.msra.mxu0 0
    %194 = vmatprep.subr.bf16.mxu0 0
    %195 = vmatpush1.bf16.msra.mxu0 0
    %196 = vmatprep.subr.bf16.mxu0 0
    %197 = vmatpush1.bf16.msra.mxu0 0
    %198 = vmatprep.subr.bf16.mxu0 0
    %199 = vmatpush1.bf16.msra.mxu0 0
    %200 = vmatprep.subr.bf16.mxu0 0
    %201 = vmatpush1.bf16.msra.mxu0 0
    %202 = vmatprep.subr.bf16.mxu0 0
    %203 = vmatpush1.bf16.msra.mxu0 0
    %204 = vmatprep.subr.bf16.mxu0 0
    %205 = vmatpush1.bf16.msra.mxu0 0
    %206 = vmatprep.subr.bf16.mxu0 0
    %207 = vmatpush1.bf16.msra.mxu0 0
    %208 = vmatprep.subr.bf16.mxu0 0
    %209 = vmatpush1.bf16.msra.mxu0 0
    %210 = vmatprep.subr.bf16.mxu0 0
    %211 = vmatpush1.bf16.msra.mxu0 0
    %212 = vmatprep.subr.bf16.mxu0 0
    %213 = vmatpush1.bf16.msra.mxu0 0
    %214 = vmatprep.subr.bf16.mxu0 0
    %215 = vmatpush1.bf16.msra.mxu0 0
    %216 = vmatprep.subr.bf16.mxu0 0
    %217 = vmatpush1.bf16.msra.mxu0 0
    %218 = vmatprep.subr.bf16.mxu0 0
    %219 = vmatpush1.bf16.msra.mxu0 0
    %220 = vmatprep.mubr.bf16.mxu0 0
    %221 = vmatmul.mubr.bf16.gmra.mrb[0].mxu0 %v186
    %v222 = vpop.f32.mrb[0].mxu0
    %v223 = vadd.f32 %v176, %v222
    %v224 = vpop.f32.mrb[0].mxu0
    %v225 = vpop.f32.mrb[0].mxu0
    %v226 = vadd.f32 %v176, %v225
    %v227 = vpop.f32.mrb[0].mxu0
    %228 = vdwg.mxu0
    %v229 = vld [vmem:[%s3] sm:$0xf]
    %v230 = vld [vmem:[%s3 + $0x4] sm:$0xf]
    %v231 = vld [vmem:[%s3 + $0x8] sm:$0xf]
    %v232 = vld [vmem:[%s3 + $0xc] sm:$0xf]
    %v233 = vld [vmem:[%s8] sm:$0x3]
    %v234 = vld [vmem:[%s9] sm:$0x3]
    %v235 = vpack.c.bf16 %v233, %v233
    %v240 = vunpack.c.l.b16 %v229
    %v241 = vunpack.c.l.b16 %v230
    %v242 = vunpack.c.l.b16 %v231
    %v243 = vunpack.c.l.b16 %v232
    %v244 = vpack.c.b16 %v241, %v240
    %v245 = vpack.c.b16 %v243, %v242
    %vm248 = vcmask 261120
    %v250 = vsel %vm248, %v235, 0
    %252 = vmatprep.subr.bf16.mxu0 0
    %253 = vmatpush1.bf16.msra.mxu0 %v244
    %254 = vmatprep.subr.bf16.mxu0 0
    %255 = vmatpush1.bf16.msra.mxu0 %v245
    %256 = vmatprep.subr.bf16.mxu0 0
    %257 = vmatpush1.bf16.msra.mxu0 0
    %258 = vmatprep.subr.bf16.mxu0 0
    %259 = vmatpush1.bf16.msra.mxu0 0
    %260 = vmatprep.subr.bf16.mxu0 0
    %261 = vmatpush1.bf16.msra.mxu0 0
    %262 = vmatprep.subr.bf16.mxu0 0
    %263 = vmatpush1.bf16.msra.mxu0 0
    %264 = vmatprep.subr.bf16.mxu0 0
    %265 = vmatpush1.bf16.msra.mxu0 0
    %266 = vmatprep.subr.bf16.mxu0 0
    %267 = vmatpush1.bf16.msra.mxu0 0
    %268 = vmatprep.subr.bf16.mxu0 0
    %269 = vmatpush1.bf16.msra.mxu0 0
    %270 = vmatprep.subr.bf16.mxu0 0
    %271 = vmatpush1.bf16.msra.mxu0 0
    %272 = vmatprep.subr.bf16.mxu0 0
    %273 = vmatpush1.bf16.msra.mxu0 0
    %274 = vmatprep.subr.bf16.mxu0 0
    %275 = vmatpush1.bf16.msra.mxu0 0
    %276 = vmatprep.subr.bf16.mxu0 0
    %277 = vmatpush1.bf16.msra.mxu0 0
    %278 = vmatprep.subr.bf16.mxu0 0
    %279 = vmatpush1.bf16.msra.mxu0 0
    %280 = vmatprep.subr.bf16.mxu0 0
    %281 = vmatpush1.bf16.msra.mxu0 0
    %282 = vmatprep.subr.bf16.mxu0 0
    %283 = vmatpush1.bf16.msra.mxu0 0
    %284 = vmatprep.mubr.bf16.mxu0 0
    %285 = vmatmul.mubr.bf16.gmra.mrb[0].mxu0 %v250
    %v286 = vpop.f32.mrb[0].mxu0
    %v287 = vadd.f32 0.0, %v286
    %v288 = vpop.f32.mrb[0].mxu0
    %v289 = vpop.f32.mrb[0].mxu0
    %v290 = vpop.f32.mrb[0].mxu0
    %291 = vdwg.mxu0
    %v292 = vadd.f32 %v223, %v287
    %v293 = vtanh.pop %v292
    %v294 = vxor.u32 %v292, 2147483648
    %v295 = vmul.f32 %v294, 1.442695
    %v296 = vpow.pop %v295
    %v297 = vadd.f32 %v296, 1.0
    %v298 = vrcp.pop %v297
    %v299 = vmul.f32 1.0, %v298
    %v300 = vsel %vm167, %v293, %v299
    %302 = vrot.lane.b32.xlu0 %v234, 32
    %v303 = vpop.permute.xlu0 %302
    %v305 = vmul.f32 %v300, %v303
    %307 = vrot.lane.b32.xlu0 %v300, 64
    %v308 = vpop.permute.xlu0 %307
    %v310 = vmul.f32 %v300, %v308
    %312 = vrot.lane.b32.xlu0 %v310, 32
    %v313 = vpop.permute.xlu0 %312
    %v315 = vadd.f32 %v305, %v313
    %v316 = vtanh.pop %v315
    %318 = vrot.lane.b32.xlu0 %v316, 64
    %v319 = vpop.permute.xlu0 %318
    %v321 = vmul.f32 %v300, %v319
    %323 = vrot.lane.b32.xlu0 %v321, 32
    %v324 = vpop.permute.xlu0 %323
    %vm326 = vcmask 254976
    %327 = vst.msk [vmem:[#allocation2] sm:$0x3] %vm326, %v324
    %v328 = vpack.c.bf16 %v321, %v321
    %330 = vrot.lane.b32.xlu0 %v328, 32
    %v331 = vpop.permute.xlu0 %330
    %v333 = vsel %vm248, %v331, 0
    %335 = vmatprep.subr.bf16.mxu0 0
    %336 = vmatpush1.bf16.msra.mxu0 %v244
    %337 = vmatprep.subr.bf16.mxu0 0
    %338 = vmatpush1.bf16.msra.mxu0 %v245
    %339 = vmatprep.subr.bf16.mxu0 0
    %340 = vmatpush1.bf16.msra.mxu0 0
    %341 = vmatprep.subr.bf16.mxu0 0
    %342 = vmatpush1.bf16.msra.mxu0 0
    %343 = vmatprep.subr.bf16.mxu0 0
    %344 = vmatpush1.bf16.msra.mxu0 0
    %345 = vmatprep.subr.bf16.mxu0 0
    %346 = vmatpush1.bf16.msra.mxu0 0
    %347 = vmatprep.subr.bf16.mxu0 0
    %348 = vmatpush1.bf16.msra.mxu0 0
    %349 = vmatprep.subr.bf16.mxu0 0
    %350 = vmatpush1.bf16.msra.mxu0 0
    %351 = vmatprep.subr.bf16.mxu0 0
    %352 = vmatpush1.bf16.msra.mxu0 0
    %353 = vmatprep.subr.bf16.mxu0 0
    %354 = vmatpush1.bf16.msra.mxu0 0
    %355 = vmatprep.subr.bf16.mxu0 0
    %356 = vmatpush1.bf16.msra.mxu0 0
    %357 = vmatprep.subr.bf16.mxu0 0
    %358 = vmatpush1.bf16.msra.mxu0 0
    %359 = vmatprep.subr.bf16.mxu0 0
    %360 = vmatpush1.bf16.msra.mxu0 0
    %361 = vmatprep.subr.bf16.mxu0 0
    %362 = vmatpush1.bf16.msra.mxu0 0
    %363 = vmatprep.subr.bf16.mxu0 0
    %364 = vmatpush1.bf16.msra.mxu0 0
    %365 = vmatprep.subr.bf16.mxu0 0
    %366 = vmatpush1.bf16.msra.mxu0 0
    %367 = vmatprep.mubr.bf16.mxu0 0
    %368 = vmatmul.mubr.bf16.gmra.mrb[0].mxu0 %v333
    %v369 = vpop.f32.mrb[0].mxu0
    %v370 = vadd.f32 0.0, %v369
    %v371 = vpop.f32.mrb[0].mxu0
    %v372 = vpop.f32.mrb[0].mxu0
    %v373 = vpop.f32.mrb[0].mxu0
    %374 = vdwg.mxu0
    %v376 = vrot.slane %v370, 6
    %v378 = vadd.f32 %v223, %v376
    %v379 = vtanh.pop %v378
    %v380 = vxor.u32 %v378, 2147483648
    %v381 = vmul.f32 %v380, 1.442695
    %v382 = vpow.pop %v381
    %v383 = vadd.f32 %v382, 1.0
    %v384 = vrcp.pop %v383
    %v385 = vmul.f32 1.0, %v384
    %v386 = vsel %vm167, %v379, %v385
    %v388 = vrot.slane %v315, 6
    %v390 = vmul.f32 %v386, %v388
    %392 = vrot.lane.b32.xlu0 %v386, 64
    %v393 = vpop.permute.xlu0 %392
    %v395 = vmul.f32 %v386, %v393
    %397 = vrot.lane.b32.xlu0 %v395, 32
    %v398 = vpop.permute.xlu0 %397
    %v400 = vadd.f32 %v390, %v398
    %v401 = vtanh.pop %v400
    %403 = vrot.lane.b32.xlu0 %v401, 64
    %v404 = vpop.permute.xlu0 %403
    %v406 = vmul.f32 %v386, %v404
    %408 = vrot.lane.b32.xlu0 %v406, 32
    %v409 = vpop.permute.xlu0 %408
    %vm411 = vcmask 257026
    %412 = vst.msk [vmem:[#allocation2] sm:$0xc] %vm411, %v409
    %v413 = vpack.c.bf16 %v406, %v406
    %v415 = vrot.slane %v413, 1
    %416 = vrot.lane.b32.xlu0 %v415, 32
    %v417 = vpop.permute.xlu0 %416
    %v419 = vsel %vm248, %v417, 0
    %421 = vmatprep.subr.bf16.mxu0 0
    %422 = vmatpush1.bf16.msra.mxu0 %v244
    %423 = vmatprep.subr.bf16.mxu0 0
    %424 = vmatpush1.bf16.msra.mxu0 %v245
    %425 = vmatprep.subr.bf16.mxu0 0
    %426 = vmatpush1.bf16.msra.mxu0 0
    %427 = vmatprep.subr.bf16.mxu0 0
    %428 = vmatpush1.bf16.msra.mxu0 0
    %429 = vmatprep.subr.bf16.mxu0 0
    %430 = vmatpush1.bf16.msra.mxu0 0
    %431 = vmatprep.subr.bf16.mxu0 0
    %432 = vmatpush1.bf16.msra.mxu0 0
    %433 = vmatprep.subr.bf16.mxu0 0
    %434 = vmatpush1.bf16.msra.mxu0 0
    %435 = vmatprep.subr.bf16.mxu0 0
    %436 = vmatpush1.bf16.msra.mxu0 0
    %437 = vmatprep.subr.bf16.mxu0 0
    %438 = vmatpush1.bf16.msra.mxu0 0
    %439 = vmatprep.subr.bf16.mxu0 0
    %440 = vmatpush1.bf16.msra.mxu0 0
    %441 = vmatprep.subr.bf16.mxu0 0
    %442 = vmatpush1.bf16.msra.mxu0 0
    %443 = vmatprep.subr.bf16.mxu0 0
    %444 = vmatpush1.bf16.msra.mxu0 0
    %445 = vmatprep.subr.bf16.mxu0 0
    %446 = vmatpush1.bf16.msra.mxu0 0
    %447 = vmatprep.subr.bf16.mxu0 0
    %448 = vmatpush1.bf16.msra.mxu0 0
    %449 = vmatprep.subr.bf16.mxu0 0
    %450 = vmatpush1.bf16.msra.mxu0 0
    %451 = vmatprep.subr.bf16.mxu0 0
    %452 = vmatpush1.bf16.msra.mxu0 0
    %453 = vmatprep.mubr.bf16.mxu0 0
    %454 = vmatmul.mubr.bf16.gmra.mrb[0].mxu0 %v419
    %v455 = vpop.f32.mrb[0].mxu0
    %v456 = vadd.f32 0.0, %v455
    %v457 = vpop.f32.mrb[0].mxu0
    %v458 = vpop.f32.mrb[0].mxu0
    %v459 = vpop.f32.mrb[0].mxu0
    %460 = vdwg.mxu0
    %v462 = vrot.slane %v456, 4
    %v464 = vadd.f32 %v223, %v462
    %v465 = vtanh.pop %v464
    %v466 = vxor.u32 %v464, 2147483648
    %v467 = vmul.f32 %v466, 1.442695
    %v468 = vpow.pop %v467
    %v469 = vadd.f32 %v468, 1.0
    %v470 = vrcp.pop %v469
    %v471 = vmul.f32 1.0, %v470
    %v472 = vsel %vm167, %v465, %v471
    %v474 = vrot.slane %v400, 6
    %v476 = vmul.f32 %v472, %v474
    %478 = vrot.lane.b32.xlu0 %v472, 64
    %v479 = vpop.permute.xlu0 %478
    %v481 = vmul.f32 %v472, %v479
    %483 = vrot.lane.b32.xlu0 %v481, 32
    %v484 = vpop.permute.xlu0 %483
    %v486 = vadd.f32 %v476, %v484
    %v487 = vtanh.pop %v486
    %489 = vrot.lane.b32.xlu0 %v487, 64
    %v490 = vpop.permute.xlu0 %489
    %v492 = vmul.f32 %v472, %v490
    %494 = vrot.lane.b32.xlu0 %v492, 32
    %v495 = vpop.permute.xlu0 %494
    %vm497 = vcmask 259076
    %498 = vst.msk [vmem:[#allocation2] sm:$0x30] %vm497, %v495
    %v499 = vpack.c.bf16 %v492, %v492
    %v501 = vrot.slane %v499, 2
    %502 = vrot.lane.b32.xlu0 %v501, 32
    %v503 = vpop.permute.xlu0 %502
    %v505 = vsel %vm248, %v503, 0
    %507 = vmatprep.subr.bf16.mxu0 0
    %508 = vmatpush1.bf16.msra.mxu0 %v244
    %509 = vmatprep.subr.bf16.mxu0 0
    %510 = vmatpush1.bf16.msra.mxu0 %v245
    %511 = vmatprep.subr.bf16.mxu0 0
    %512 = vmatpush1.bf16.msra.mxu0 0
    %513 = vmatprep.subr.bf16.mxu0 0
    %514 = vmatpush1.bf16.msra.mxu0 0
    %515 = vmatprep.subr.bf16.mxu0 0
    %516 = vmatpush1.bf16.msra.mxu0 0
    %517 = vmatprep.subr.bf16.mxu0 0
    %518 = vmatpush1.bf16.msra.mxu0 0
    %519 = vmatprep.subr.bf16.mxu0 0
    %520 = vmatpush1.bf16.msra.mxu0 0
    %521 = vmatprep.subr.bf16.mxu0 0
    %522 = vmatpush1.bf16.msra.mxu0 0
    %523 = vmatprep.subr.bf16.mxu0 0
    %524 = vmatpush1.bf16.msra.mxu0 0
    %525 = vmatprep.subr.bf16.mxu0 0
    %526 = vmatpush1.bf16.msra.mxu0 0
    %527 = vmatprep.subr.bf16.mxu0 0
    %528 = vmatpush1.bf16.msra.mxu0 0
    %529 = vmatprep.subr.bf16.mxu0 0
    %530 = vmatpush1.bf16.msra.mxu0 0
    %531 = vmatprep.subr.bf16.mxu0 0
    %532 = vmatpush1.bf16.msra.mxu0 0
    %533 = vmatprep.subr.bf16.mxu0 0
    %534 = vmatpush1.bf16.msra.mxu0 0
    %535 = vmatprep.subr.bf16.mxu0 0
    %536 = vmatpush1.bf16.msra.mxu0 0
    %537 = vmatprep.subr.bf16.mxu0 0
    %538 = vmatpush1.bf16.msra.mxu0 0
    %539 = vmatprep.mubr.bf16.mxu0 0
    %540 = vmatmul.mubr.bf16.gmra.mrb[0].mxu0 %v505
    %v541 = vpop.f32.mrb[0].mxu0
    %v542 = vadd.f32 0.0, %v541
    %v543 = vpop.f32.mrb[0].mxu0
    %v544 = vpop.f32.mrb[0].mxu0
    %v545 = vpop.f32.mrb[0].mxu0
    %546 = vdwg.mxu0
    %v548 = vrot.slane %v542, 2
    %v550 = vadd.f32 %v223, %v548
    %v551 = vtanh.pop %v550
    %v552 = vxor.u32 %v550, 2147483648
    %v553 = vmul.f32 %v552, 1.442695
    %v554 = vpow.pop %v553
    %v555 = vadd.f32 %v554, 1.0
    %v556 = vrcp.pop %v555
    %v557 = vmul.f32 1.0, %v556
    %v558 = vsel %vm167, %v551, %v557
    %v560 = vrot.slane %v486, 6
    %v562 = vmul.f32 %v558, %v560
    %564 = vrot.lane.b32.xlu0 %v558, 64
    %v565 = vpop.permute.xlu0 %564
    %v567 = vmul.f32 %v558, %v565
    %569 = vrot.lane.b32.xlu0 %v567, 32
    %v570 = vpop.permute.xlu0 %569
    %v572 = vadd.f32 %v562, %v570
    %v573 = vtanh.pop %v572
    %575 = vrot.lane.b32.xlu0 %v573, 64
    %v576 = vpop.permute.xlu0 %575
    %v578 = vmul.f32 %v558, %v576
    %580 = vrot.lane.b32.xlu0 %v578, 32
    %v581 = vpop.permute.xlu0 %580
    %vm583 = vcmask 261126
    %584 = vst.msk [vmem:[#allocation2] sm:$0xc0] %vm583, %v581
    %v585 = vpack.c.bf16 %v578, %v578
    %v587 = vrot.slane %v585, 3
    %588 = vrot.lane.b32.xlu0 %v587, 32
    %v589 = vpop.permute.xlu0 %588
    %v591 = vsel %vm248, %v589, 0
    %593 = vmatprep.subr.bf16.mxu0 0
    %594 = vmatpush1.bf16.msra.mxu0 %v244
    %595 = vmatprep.subr.bf16.mxu0 0
    %596 = vmatpush1.bf16.msra.mxu0 %v245
    %597 = vmatprep.subr.bf16.mxu0 0
    %598 = vmatpush1.bf16.msra.mxu0 0
    %599 = vmatprep.subr.bf16.mxu0 0
    %600 = vmatpush1.bf16.msra.mxu0 0
    %601 = vmatprep.subr.bf16.mxu0 0
    %602 = vmatpush1.bf16.msra.mxu0 0
    %603 = vmatprep.subr.bf16.mxu0 0
    %604 = vmatpush1.bf16.msra.mxu0 0
    %605 = vmatprep.subr.bf16.mxu0 0
    %606 = vmatpush1.bf16.msra.mxu0 0
    %607 = vmatprep.subr.bf16.mxu0 0
    %608 = vmatpush1.bf16.msra.mxu0 0
    %609 = vmatprep.subr.bf16.mxu0 0
    %610 = vmatpush1.bf16.msra.mxu0 0
    %611 = vmatprep.subr.bf16.mxu0 0
    %612 = vmatpush1.bf16.msra.mxu0 0
    %613 = vmatprep.subr.bf16.mxu0 0
    %614 = vmatpush1.bf16.msra.mxu0 0
    %615 = vmatprep.subr.bf16.mxu0 0
    %616 = vmatpush1.bf16.msra.mxu0 0
    %617 = vmatprep.subr.bf16.mxu0 0
    %618 = vmatpush1.bf16.msra.mxu0 0
    %619 = vmatprep.subr.bf16.mxu0 0
    %620 = vmatpush1.bf16.msra.mxu0 0
    %621 = vmatprep.subr.bf16.mxu0 0
    %622 = vmatpush1.bf16.msra.mxu0 0
    %623 = vmatprep.subr.bf16.mxu0 0
    %624 = vmatpush1.bf16.msra.mxu0 0
    %625 = vmatprep.mubr.bf16.mxu0 0
    %626 = vmatmul.mubr.bf16.gmra.mrb[0].mxu0 %v591
    %v627 = vpop.f32.mrb[0].mxu0
    %v628 = vadd.f32 0.0, %v627
    %v629 = vpop.f32.mrb[0].mxu0
    %v630 = vpop.f32.mrb[0].mxu0
    %v631 = vpop.f32.mrb[0].mxu0
    %632 = vdwg.mxu0
    %v633 = vadd.f32 %v226, %v628
    %v634 = vtanh.pop %v633
    %v635 = vxor.u32 %v633, 2147483648
    %v636 = vmul.f32 %v635, 1.442695
    %v637 = vpow.pop %v636
    %v638 = vadd.f32 %v637, 1.0
    %v639 = vrcp.pop %v638
    %v640 = vmul.f32 1.0, %v639
    %v641 = vsel %vm167, %v634, %v640
    %v643 = vrot.slane %v572, 6
    %v645 = vmul.f32 %v641, %v643
    %647 = vrot.lane.b32.xlu0 %v641, 64
    %v648 = vpop.permute.xlu0 %647
    %v650 = vmul.f32 %v641, %v648
    %652 = vrot.lane.b32.xlu0 %v650, 32
    %v653 = vpop.permute.xlu0 %652
    %v655 = vadd.f32 %v645, %v653
    %v656 = vtanh.pop %v655
    %658 = vrot.lane.b32.xlu0 %v656, 64
    %v659 = vpop.permute.xlu0 %658
    %v661 = vmul.f32 %v641, %v659
    %663 = vrot.lane.b32.xlu0 %v661, 32
    %v664 = vpop.permute.xlu0 %663
    %666 = vst.msk [vmem:[#allocation2 + $0x8] sm:$0x3] %vm326, %v664
    %v667 = vpack.c.bf16 %v661, %v661
    %669 = vrot.lane.b32.xlu0 %v667, 32
    %v670 = vpop.permute.xlu0 %669
    %v672 = vsel %vm248, %v670, 0
    %674 = vmatprep.subr.bf16.mxu0 0
    %675 = vmatpush1.bf16.msra.mxu0 %v244
    %676 = vmatprep.subr.bf16.mxu0 0
    %677 = vmatpush1.bf16.msra.mxu0 %v245
    %678 = vmatprep.subr.bf16.mxu0 0
    %679 = vmatpush1.bf16.msra.mxu0 0
    %680 = vmatprep.subr.bf16.mxu0 0
    %681 = vmatpush1.bf16.msra.mxu0 0
    %682 = vmatprep.subr.bf16.mxu0 0
    %683 = vmatpush1.bf16.msra.mxu0 0
    %684 = vmatprep.subr.bf16.mxu0 0
    %685 = vmatpush1.bf16.msra.mxu0 0
    %686 = vmatprep.subr.bf16.mxu0 0
    %687 = vmatpush1.bf16.msra.mxu0 0
    %688 = vmatprep.subr.bf16.mxu0 0
    %689 = vmatpush1.bf16.msra.mxu0 0
    %690 = vmatprep.subr.bf16.mxu0 0
    %691 = vmatpush1.bf16.msra.mxu0 0
    %692 = vmatprep.subr.bf16.mxu0 0
    %693 = vmatpush1.bf16.msra.mxu0 0
    %694 = vmatprep.subr.bf16.mxu0 0
    %695 = vmatpush1.bf16.msra.mxu0 0
    %696 = vmatprep.subr.bf16.mxu0 0
    %697 = vmatpush1.bf16.msra.mxu0 0
    %698 = vmatprep.subr.bf16.mxu0 0
    %699 = vmatpush1.bf16.msra.mxu0 0
    %700 = vmatprep.subr.bf16.mxu0 0
    %701 = vmatpush1.bf16.msra.mxu0 0
    %702 = vmatprep.subr.bf16.mxu0 0
    %703 = vmatpush1.bf16.msra.mxu0 0
    %704 = vmatprep.subr.bf16.mxu0 0
    %705 = vmatpush1.bf16.msra.mxu0 0
    %706 = vmatprep.mubr.bf16.mxu0 0
    %707 = vmatmul.mubr.bf16.gmra.mrb[0].mxu0 %v672
    %v708 = vpop.f32.mrb[0].mxu0
    %v709 = vadd.f32 0.0, %v708
    %v710 = vpop.f32.mrb[0].mxu0
    %v711 = vpop.f32.mrb[0].mxu0
    %v712 = vpop.f32.mrb[0].mxu0
    %713 = vdwg.mxu0
    %v715 = vrot.slane %v709, 6
    %v717 = vadd.f32 %v226, %v715
    %v718 = vtanh.pop %v717
    %v719 = vxor.u32 %v717, 2147483648
    %v720 = vmul.f32 %v719, 1.442695
    %v721 = vpow.pop %v720
    %v722 = vadd.f32 %v721, 1.0
    %v723 = vrcp.pop %v722
    %v724 = vmul.f32 1.0, %v723
    %v725 = vsel %vm167, %v718, %v724
    %v727 = vrot.slane %v655, 6
    %v729 = vmul.f32 %v725, %v727
    %731 = vrot.lane.b32.xlu0 %v725, 64
    %v732 = vpop.permute.xlu0 %731
    %v734 = vmul.f32 %v725, %v732
    %736 = vrot.lane.b32.xlu0 %v734, 32
    %v737 = vpop.permute.xlu0 %736
    %v739 = vadd.f32 %v729, %v737
    %v740 = vtanh.pop %v739
    %742 = vrot.lane.b32.xlu0 %v740, 64
    %v743 = vpop.permute.xlu0 %742
    %v745 = vmul.f32 %v725, %v743
    %747 = vrot.lane.b32.xlu0 %v745, 32
    %v748 = vpop.permute.xlu0 %747
    %750 = vst.msk [vmem:[#allocation2 + $0x8] sm:$0xc] %vm411, %v748
    %v751 = vpack.c.bf16 %v745, %v745
    %v753 = vrot.slane %v751, 1
    %754 = vrot.lane.b32.xlu0 %v753, 32
    %v755 = vpop.permute.xlu0 %754
    %v757 = vsel %vm248, %v755, 0
    %759 = vmatprep.subr.bf16.mxu0 0
    %760 = vmatpush1.bf16.msra.mxu0 %v244
    %761 = vmatprep.subr.bf16.mxu0 0
    %762 = vmatpush1.bf16.msra.mxu0 %v245
    %763 = vmatprep.subr.bf16.mxu0 0
    %764 = vmatpush1.bf16.msra.mxu0 0
    %765 = vmatprep.subr.bf16.mxu0 0
    %766 = vmatpush1.bf16.msra.mxu0 0
    %767 = vmatprep.subr.bf16.mxu0 0
    %768 = vmatpush1.bf16.msra.mxu0 0
    %769 = vmatprep.subr.bf16.mxu0 0
    %770 = vmatpush1.bf16.msra.mxu0 0
    %771 = vmatprep.subr.bf16.mxu0 0
    %772 = vmatpush1.bf16.msra.mxu0 0
    %773 = vmatprep.subr.bf16.mxu0 0
    %774 = vmatpush1.bf16.msra.mxu0 0
    %775 = vmatprep.subr.bf16.mxu0 0
    %776 = vmatpush1.bf16.msra.mxu0 0
    %777 = vmatprep.subr.bf16.mxu0 0
    %778 = vmatpush1.bf16.msra.mxu0 0
    %779 = vmatprep.subr.bf16.mxu0 0
    %780 = vmatpush1.bf16.msra.mxu0 0
    %781 = vmatprep.subr.bf16.mxu0 0
    %782 = vmatpush1.bf16.msra.mxu0 0
    %783 = vmatprep.subr.bf16.mxu0 0
    %784 = vmatpush1.bf16.msra.mxu0 0
    %785 = vmatprep.subr.bf16.mxu0 0
    %786 = vmatpush1.bf16.msra.mxu0 0
    %787 = vmatprep.subr.bf16.mxu0 0
    %788 = vmatpush1.bf16.msra.mxu0 0
    %789 = vmatprep.subr.bf16.mxu0 0
    %790 = vmatpush1.bf16.msra.mxu0 0
    %791 = vmatprep.mubr.bf16.mxu0 0
    %792 = vmatmul.mubr.bf16.gmra.mrb[0].mxu0 %v757
    %v793 = vpop.f32.mrb[0].mxu0
    %v794 = vadd.f32 0.0, %v793
    %v795 = vpop.f32.mrb[0].mxu0
    %v796 = vpop.f32.mrb[0].mxu0
    %v797 = vpop.f32.mrb[0].mxu0
    %798 = vdwg.mxu0
    %v800 = vrot.slane %v794, 4
    %v802 = vadd.f32 %v226, %v800
    %v803 = vtanh.pop %v802
    %v804 = vxor.u32 %v802, 2147483648
    %v805 = vmul.f32 %v804, 1.442695
    %v806 = vpow.pop %v805
    %v807 = vadd.f32 %v806, 1.0
    %v808 = vrcp.pop %v807
    %v809 = vmul.f32 1.0, %v808
    %v810 = vsel %vm167, %v803, %v809
    %v812 = vrot.slane %v739, 6
    %v814 = vmul.f32 %v810, %v812
    %816 = vrot.lane.b32.xlu0 %v810, 64
    %v817 = vpop.permute.xlu0 %816
    %v819 = vmul.f32 %v810, %v817
    %821 = vrot.lane.b32.xlu0 %v819, 32
    %v822 = vpop.permute.xlu0 %821
    %v824 = vadd.f32 %v814, %v822
    %v825 = vtanh.pop %v824
    %827 = vrot.lane.b32.xlu0 %v825, 64
    %v828 = vpop.permute.xlu0 %827
    %v830 = vmul.f32 %v810, %v828
    %832 = vrot.lane.b32.xlu0 %v830, 32
    %v833 = vpop.permute.xlu0 %832
    %835 = vst.msk [vmem:[#allocation2 + $0x8] sm:$0x30] %vm497, %v833
    %v836 = vpack.c.bf16 %v830, %v830
    %v838 = vrot.slane %v836, 2
    %839 = vrot.lane.b32.xlu0 %v838, 32
    %v840 = vpop.permute.xlu0 %839
    %v842 = vsel %vm248, %v840, 0
    %844 = vmatprep.subr.bf16.mxu0 0
    %845 = vmatpush1.bf16.msra.mxu0 %v244
    %846 = vmatprep.subr.bf16.mxu0 0
    %847 = vmatpush1.bf16.msra.mxu0 %v245
    %848 = vmatprep.subr.bf16.mxu0 0
    %849 = vmatpush1.bf16.msra.mxu0 0
    %850 = vmatprep.subr.bf16.mxu0 0
    %851 = vmatpush1.bf16.msra.mxu0 0
    %852 = vmatprep.subr.bf16.mxu0 0
    %853 = vmatpush1.bf16.msra.mxu0 0
    %854 = vmatprep.subr.bf16.mxu0 0
    %855 = vmatpush1.bf16.msra.mxu0 0
    %856 = vmatprep.subr.bf16.mxu0 0
    %857 = vmatpush1.bf16.msra.mxu0 0
    %858 = vmatprep.subr.bf16.mxu0 0
    %859 = vmatpush1.bf16.msra.mxu0 0
    %860 = vmatprep.subr.bf16.mxu0 0
    %861 = vmatpush1.bf16.msra.mxu0 0
    %862 = vmatprep.subr.bf16.mxu0 0
    %863 = vmatpush1.bf16.msra.mxu0 0
    %864 = vmatprep.subr.bf16.mxu0 0
    %865 = vmatpush1.bf16.msra.mxu0 0
    %866 = vmatprep.subr.bf16.mxu0 0
    %867 = vmatpush1.bf16.msra.mxu0 0
    %868 = vmatprep.subr.bf16.mxu0 0
    %869 = vmatpush1.bf16.msra.mxu0 0
    %870 = vmatprep.subr.bf16.mxu0 0
    %871 = vmatpush1.bf16.msra.mxu0 0
    %872 = vmatprep.subr.bf16.mxu0 0
    %873 = vmatpush1.bf16.msra.mxu0 0
    %874 = vmatprep.subr.bf16.mxu0 0
    %875 = vmatpush1.bf16.msra.mxu0 0
    %876 = vmatprep.mubr.bf16.mxu0 0
    %877 = vmatmul.mubr.bf16.gmra.mrb[0].mxu0 %v842
    %v878 = vpop.f32.mrb[0].mxu0
    %v879 = vadd.f32 0.0, %v878
    %v880 = vpop.f32.mrb[0].mxu0
    %v881 = vpop.f32.mrb[0].mxu0
    %v882 = vpop.f32.mrb[0].mxu0
    %883 = vdwg.mxu0
    %v885 = vrot.slane %v879, 2
    %v887 = vadd.f32 %v226, %v885
    %v888 = vtanh.pop %v887
    %v889 = vxor.u32 %v887, 2147483648
    %v890 = vmul.f32 %v889, 1.442695
    %v891 = vpow.pop %v890
    %v892 = vadd.f32 %v891, 1.0
    %v893 = vrcp.pop %v892
    %v894 = vmul.f32 1.0, %v893
    %v895 = vsel %vm167, %v888, %v894
    %v897 = vrot.slane %v824, 6
    %v899 = vmul.f32 %v895, %v897
    %901 = vrot.lane.b32.xlu0 %v895, 64
    %v902 = vpop.permute.xlu0 %901
    %v904 = vmul.f32 %v895, %v902
    %906 = vrot.lane.b32.xlu0 %v904, 32
    %v907 = vpop.permute.xlu0 %906
    %v909 = vadd.f32 %v899, %v907
    %v910 = vtanh.pop %v909
    %912 = vrot.lane.b32.xlu0 %v910, 64
    %v913 = vpop.permute.xlu0 %912
    %v915 = vmul.f32 %v895, %v913
    %917 = vrot.lane.b32.xlu0 %v915, 32
    %v918 = vpop.permute.xlu0 %917
    %920 = vst.msk [vmem:[#allocation2 + $0x8] sm:$0xc0] %vm583, %v918
    %921 = vst.msk [vmem:[#allocation3 - $0x6] sm:$0xc0] %vm583, %v918
    %923 = vrot.lane.b32.xlu0 %v909, 96
    %v924 = vpop.permute.xlu0 %923
    %926 = vst.msk [vmem:[#allocation5 - $0x6] sm:$0xc0] %vm583, %v924
    %v927 = vld [vmem:[#allocation2] sm:$0xff]
    %v928 = vld [vmem:[#allocation2 + $0x8] sm:$0xff]
    %v929 = vpack.c.bf16 %v928, %v927
    %v930 = vld [vmem:[%s5] sm:$0xf]
    %v931 = vld [vmem:[%s5 + $0x4] sm:$0xf]
    %v932 = vld [vmem:[%s5 + $0x8] sm:$0xf]
    %v933 = vld [vmem:[%s5 + $0xc] sm:$0xf]
    %v934 = vld [vmem:[%s7] sm:$0x1]
    %v936 = vlaneseq
    %v937 = vshrl.u32 %v936, 7
    %v938 = vsub.s32 0, %v937
    %v939 = vrot.slane %v934, %v938
    %v945 = vunpack.c.l.b16 %v930
    %v946 = vunpack.c.l.b16 %v931
    %v947 = vunpack.c.l.b16 %v932
    %v948 = vunpack.c.l.b16 %v933
    %v949 = vpack.c.b16 %v946, %v945
    %v950 = vpack.c.b16 %v948, %v947
    %v954 = vsel %vm248, %v929, 0
    %956 = vmatprep.subr.bf16.mxu0 0
    %957 = vmatpush1.bf16.msra.mxu0 %v949
    %958 = vmatprep.subr.bf16.mxu0 0
    %959 = vmatpush1.bf16.msra.mxu0 %v950
    %960 = vmatprep.subr.bf16.mxu0 0
    %961 = vmatpush1.bf16.msra.mxu0 0
    %962 = vmatprep.subr.bf16.mxu0 0
    %963 = vmatpush1.bf16.msra.mxu0 0
    %964 = vmatprep.subr.bf16.mxu0 0
    %965 = vmatpush1.bf16.msra.mxu0 0
    %966 = vmatprep.subr.bf16.mxu0 0
    %967 = vmatpush1.bf16.msra.mxu0 0
    %968 = vmatprep.subr.bf16.mxu0 0
    %969 = vmatpush1.bf16.msra.mxu0 0
    %970 = vmatprep.subr.bf16.mxu0 0
    %971 = vmatpush1.bf16.msra.mxu0 0
    %972 = vmatprep.subr.bf16.mxu0 0
    %973 = vmatpush1.bf16.msra.mxu0 0
    %974 = vmatprep.subr.bf16.mxu0 0
    %975 = vmatpush1.bf16.msra.mxu0 0
    %976 = vmatprep.subr.bf16.mxu0 0
    %977 = vmatpush1.bf16.msra.mxu0 0
    %978 = vmatprep.subr.bf16.mxu0 0
    %979 = vmatpush1.bf16.msra.mxu0 0
    %980 = vmatprep.subr.bf16.mxu0 0
    %981 = vmatpush1.bf16.msra.mxu0 0
    %982 = vmatprep.subr.bf16.mxu0 0
    %983 = vmatpush1.bf16.msra.mxu0 0
    %984 = vmatprep.subr.bf16.mxu0 0
    %985 = vmatpush1.bf16.msra.mxu0 0
    %986 = vmatprep.subr.bf16.mxu0 0
    %987 = vmatpush1.bf16.msra.mxu0 0
    %988 = vmatprep.mubr.bf16.mxu0 0
    %989 = vmatmul.mubr.bf16.gmra.mrb[0].mxu0 %v954
    %v990 = vpop.f32.mrb[0].mxu0
    %v991 = vadd.f32 %v939, %v990
    %v992 = vpop.f32.mrb[0].mxu0
    %v993 = vpop.f32.mrb[0].mxu0
    %v994 = vadd.f32 %v939, %v993
    %v995 = vpop.f32.mrb[0].mxu0
    %996 = vdwg.mxu0
    %v997 = vld [vmem:[%s6] sm:$0xf]
    %v998 = vld [vmem:[%s6 + $0x4] sm:$0xf]
    %v999 = vld [vmem:[%s6 + $0x8] sm:$0xf]
    %v1000 = vld [vmem:[%s6 + $0xc] sm:$0xf]
    %s1001 = scalar_lea.vmem %s8, 2
    %v1002 = vld [vmem:[%s1001] sm:$0x3]
    %s1003 = scalar_lea.vmem %s9, 2
    %v1004 = vld [vmem:[%s1003] sm:$0x3]
    %v1005 = vpack.c.bf16 %v1002, %v1002
    %v1010 = vunpack.c.l.b16 %v997
    %v1011 = vunpack.c.l.b16 %v998
    %v1012 = vunpack.c.l.b16 %v999
    %v1013 = vunpack.c.l.b16 %v1000
    %v1014 = vpack.c.b16 %v1011, %v1010
    %v1015 = vpack.c.b16 %v1013, %v1012
    %v1019 = vsel %vm248, %v1005, 0
    %1021 = vmatprep.subr.bf16.mxu0 0
    %1022 = vmatpush1.bf16.msra.mxu0 %v1014
    %1023 = vmatprep.subr.bf16.mxu0 0
    %1024 = vmatpush1.bf16.msra.mxu0 %v1015
    %1025 = vmatprep.subr.bf16.mxu0 0
    %1026 = vmatpush1.bf16.msra.mxu0 0
    %1027 = vmatprep.subr.bf16.mxu0 0
    %1028 = vmatpush1.bf16.msra.mxu0 0
    %1029 = vmatprep.subr.bf16.mxu0 0
    %1030 = vmatpush1.bf16.msra.mxu0 0
    %1031 = vmatprep.subr.bf16.mxu0 0
    %1032 = vmatpush1.bf16.msra.mxu0 0
    %1033 = vmatprep.subr.bf16.mxu0 0
    %1034 = vmatpush1.bf16.msra.mxu0 0
    %1035 = vmatprep.subr.bf16.mxu0 0
    %1036 = vmatpush1.bf16.msra.mxu0 0
    %1037 = vmatprep.subr.bf16.mxu0 0
    %1038 = vmatpush1.bf16.msra.mxu0 0
    %1039 = vmatprep.subr.bf16.mxu0 0
    %1040 = vmatpush1.bf16.msra.mxu0 0
    %1041 = vmatprep.subr.bf16.mxu0 0
    %1042 = vmatpush1.bf16.msra.mxu0 0
    %1043 = vmatprep.subr.bf16.mxu0 0
    %1044 = vmatpush1.bf16.msra.mxu0 0
    %1045 = vmatprep.subr.bf16.mxu0 0
    %1046 = vmatpush1.bf16.msra.mxu0 0
    %1047 = vmatprep.subr.bf16.mxu0 0
    %1048 = vmatpush1.bf16.msra.mxu0 0
    %1049 = vmatprep.subr.bf16.mxu0 0
    %1050 = vmatpush1.bf16.msra.mxu0 0
    %1051 = vmatprep.subr.bf16.mxu0 0
    %1052 = vmatpush1.bf16.msra.mxu0 0
    %1053 = vmatprep.mubr.bf16.mxu0 0
    %1054 = vmatmul.mubr.bf16.gmra.mrb[0].mxu0 %v1019
    %v1055 = vpop.f32.mrb[0].mxu0
    %v1056 = vadd.f32 0.0, %v1055
    %v1057 = vpop.f32.mrb[0].mxu0
    %v1058 = vpop.f32.mrb[0].mxu0
    %v1059 = vpop.f32.mrb[0].mxu0
    %1060 = vdwg.mxu0
    %v1061 = vadd.f32 %v991, %v1056
    %v1062 = vtanh.pop %v1061
    %v1063 = vxor.u32 %v1061, 2147483648
    %v1064 = vmul.f32 %v1063, 1.442695
    %v1065 = vpow.pop %v1064
    %v1066 = vadd.f32 %v1065, 1.0
    %v1067 = vrcp.pop %v1066
    %v1068 = vmul.f32 1.0, %v1067
    %v1069 = vsel %vm167, %v1062, %v1068
    %1071 = vrot.lane.b32.xlu0 %v1004, 32
    %v1072 = vpop.permute.xlu0 %1071
    %v1074 = vmul.f32 %v1069, %v1072
    %1076 = vrot.lane.b32.xlu0 %v1069, 64
    %v1077 = vpop.permute.xlu0 %1076
    %v1079 = vmul.f32 %v1069, %v1077
    %1081 = vrot.lane.b32.xlu0 %v1079, 32
    %v1082 = vpop.permute.xlu0 %1081
    %v1084 = vadd.f32 %v1074, %v1082
    %v1085 = vtanh.pop %v1084
    %1087 = vrot.lane.b32.xlu0 %v1085, 64
    %v1088 = vpop.permute.xlu0 %1087
    %v1090 = vmul.f32 %v1069, %v1088
    %1092 = vrot.lane.b32.xlu0 %v1090, 32
    %v1093 = vpop.permute.xlu0 %1092
    %1095 = vst.msk [vmem:[#allocation2] sm:$0x3] %vm326, %v1093
    %v1096 = vpack.c.bf16 %v1090, %v1090
    %1098 = vrot.lane.b32.xlu0 %v1096, 32
    %v1099 = vpop.permute.xlu0 %1098
    %v1101 = vsel %vm248, %v1099, 0
    %1103 = vmatprep.subr.bf16.mxu0 0
    %1104 = vmatpush1.bf16.msra.mxu0 %v1014
    %1105 = vmatprep.subr.bf16.mxu0 0
    %1106 = vmatpush1.bf16.msra.mxu0 %v1015
    %1107 = vmatprep.subr.bf16.mxu0 0
    %1108 = vmatpush1.bf16.msra.mxu0 0
    %1109 = vmatprep.subr.bf16.mxu0 0
    %1110 = vmatpush1.bf16.msra.mxu0 0
    %1111 = vmatprep.subr.bf16.mxu0 0
    %1112 = vmatpush1.bf16.msra.mxu0 0
    %1113 = vmatprep.subr.bf16.mxu0 0
    %1114 = vmatpush1.bf16.msra.mxu0 0
    %1115 = vmatprep.subr.bf16.mxu0 0
    %1116 = vmatpush1.bf16.msra.mxu0 0
    %1117 = vmatprep.subr.bf16.mxu0 0
    %1118 = vmatpush1.bf16.msra.mxu0 0
    %1119 = vmatprep.subr.bf16.mxu0 0
    %1120 = vmatpush1.bf16.msra.mxu0 0
    %1121 = vmatprep.subr.bf16.mxu0 0
    %1122 = vmatpush1.bf16.msra.mxu0 0
    %1123 = vmatprep.subr.bf16.mxu0 0
    %1124 = vmatpush1.bf16.msra.mxu0 0
    %1125 = vmatprep.subr.bf16.mxu0 0
    %1126 = vmatpush1.bf16.msra.mxu0 0
    %1127 = vmatprep.subr.bf16.mxu0 0
    %1128 = vmatpush1.bf16.msra.mxu0 0
    %1129 = vmatprep.subr.bf16.mxu0 0
    %1130 = vmatpush1.bf16.msra.mxu0 0
    %1131 = vmatprep.subr.bf16.mxu0 0
    %1132 = vmatpush1.bf16.msra.mxu0 0
    %1133 = vmatprep.subr.bf16.mxu0 0
    %1134 = vmatpush1.bf16.msra.mxu0 0
    %1135 = vmatprep.mubr.bf16.mxu0 0
    %1136 = vmatmul.mubr.bf16.gmra.mrb[0].mxu0 %v1101
    %v1137 = vpop.f32.mrb[0].mxu0
    %v1138 = vadd.f32 0.0, %v1137
    %v1139 = vpop.f32.mrb[0].mxu0
    %v1140 = vpop.f32.mrb[0].mxu0
    %v1141 = vpop.f32.mrb[0].mxu0
    %1142 = vdwg.mxu0
    %v1144 = vrot.slane %v1138, 6
    %v1146 = vadd.f32 %v991, %v1144
    %v1147 = vtanh.pop %v1146
    %v1148 = vxor.u32 %v1146, 2147483648
    %v1149 = vmul.f32 %v1148, 1.442695
    %v1150 = vpow.pop %v1149
    %v1151 = vadd.f32 %v1150, 1.0
    %v1152 = vrcp.pop %v1151
    %v1153 = vmul.f32 1.0, %v1152
    %v1154 = vsel %vm167, %v1147, %v1153
    %v1156 = vrot.slane %v1084, 6
    %v1158 = vmul.f32 %v1154, %v1156
    %1160 = vrot.lane.b32.xlu0 %v1154, 64
    %v1161 = vpop.permute.xlu0 %1160
    %v1163 = vmul.f32 %v1154, %v1161
    %1165 = vrot.lane.b32.xlu0 %v1163, 32
    %v1166 = vpop.permute.xlu0 %1165
    %v1168 = vadd.f32 %v1158, %v1166
    %v1169 = vtanh.pop %v1168
    %1171 = vrot.lane.b32.xlu0 %v1169, 64
    %v1172 = vpop.permute.xlu0 %1171
    %v1174 = vmul.f32 %v1154, %v1172
    %1176 = vrot.lane.b32.xlu0 %v1174, 32
    %v1177 = vpop.permute.xlu0 %1176
    %1179 = vst.msk [vmem:[#allocation2] sm:$0xc] %vm411, %v1177
    %v1180 = vpack.c.bf16 %v1174, %v1174
    %v1182 = vrot.slane %v1180, 1
    %1183 = vrot.lane.b32.xlu0 %v1182, 32
    %v1184 = vpop.permute.xlu0 %1183
    %v1186 = vsel %vm248, %v1184, 0
    %1188 = vmatprep.subr.bf16.mxu0 0
    %1189 = vmatpush1.bf16.msra.mxu0 %v1014
    %1190 = vmatprep.subr.bf16.mxu0 0
    %1191 = vmatpush1.bf16.msra.mxu0 %v1015
    %1192 = vmatprep.subr.bf16.mxu0 0
    %1193 = vmatpush1.bf16.msra.mxu0 0
    %1194 = vmatprep.subr.bf16.mxu0 0
    %1195 = vmatpush1.bf16.msra.mxu0 0
    %1196 = vmatprep.subr.bf16.mxu0 0
    %1197 = vmatpush1.bf16.msra.mxu0 0
    %1198 = vmatprep.subr.bf16.mxu0 0
    %1199 = vmatpush1.bf16.msra.mxu0 0
    %1200 = vmatprep.subr.bf16.mxu0 0
    %1201 = vmatpush1.bf16.msra.mxu0 0
    %1202 = vmatprep.subr.bf16.mxu0 0
    %1203 = vmatpush1.bf16.msra.mxu0 0
    %1204 = vmatprep.subr.bf16.mxu0 0
    %1205 = vmatpush1.bf16.msra.mxu0 0
    %1206 = vmatprep.subr.bf16.mxu0 0
    %1207 = vmatpush1.bf16.msra.mxu0 0
    %1208 = vmatprep.subr.bf16.mxu0 0
    %1209 = vmatpush1.bf16.msra.mxu0 0
    %1210 = vmatprep.subr.bf16.mxu0 0
    %1211 = vmatpush1.bf16.msra.mxu0 0
    %1212 = vmatprep.subr.bf16.mxu0 0
    %1213 = vmatpush1.bf16.msra.mxu0 0
    %1214 = vmatprep.subr.bf16.mxu0 0
    %1215 = vmatpush1.bf16.msra.mxu0 0
    %1216 = vmatprep.subr.bf16.mxu0 0
    %1217 = vmatpush1.bf16.msra.mxu0 0
    %1218 = vmatprep.subr.bf16.mxu0 0
    %1219 = vmatpush1.bf16.msra.mxu0 0
    %1220 = vmatprep.mubr.bf16.mxu0 0
    %1221 = vmatmul.mubr.bf16.gmra.mrb[0].mxu0 %v1186
    %v1222 = vpop.f32.mrb[0].mxu0
    %v1223 = vadd.f32 0.0, %v1222
    %v1224 = vpop.f32.mrb[0].mxu0
    %v1225 = vpop.f32.mrb[0].mxu0
    %v1226 = vpop.f32.mrb[0].mxu0
    %1227 = vdwg.mxu0
    %v1229 = vrot.slane %v1223, 4
    %v1231 = vadd.f32 %v991, %v1229
    %v1232 = vtanh.pop %v1231
    %v1233 = vxor.u32 %v1231, 2147483648
    %v1234 = vmul.f32 %v1233, 1.442695
    %v1235 = vpow.pop %v1234
    %v1236 = vadd.f32 %v1235, 1.0
    %v1237 = vrcp.pop %v1236
    %v1238 = vmul.f32 1.0, %v1237
    %v1239 = vsel %vm167, %v1232, %v1238
    %v1241 = vrot.slane %v1168, 6
    %v1243 = vmul.f32 %v1239, %v1241
    %1245 = vrot.lane.b32.xlu0 %v1239, 64
    %v1246 = vpop.permute.xlu0 %1245
    %v1248 = vmul.f32 %v1239, %v1246
    %1250 = vrot.lane.b32.xlu0 %v1248, 32
    %v1251 = vpop.permute.xlu0 %1250
    %v1253 = vadd.f32 %v1243, %v1251
    %v1254 = vtanh.pop %v1253
    %1256 = vrot.lane.b32.xlu0 %v1254, 64
    %v1257 = vpop.permute.xlu0 %1256
    %v1259 = vmul.f32 %v1239, %v1257
    %1261 = vrot.lane.b32.xlu0 %v1259, 32
    %v1262 = vpop.permute.xlu0 %1261
    %1264 = vst.msk [vmem:[#allocation2] sm:$0x30] %vm497, %v1262
    %v1265 = vpack.c.bf16 %v1259, %v1259
    %v1267 = vrot.slane %v1265, 2
    %1268 = vrot.lane.b32.xlu0 %v1267, 32
    %v1269 = vpop.permute.xlu0 %1268
    %v1271 = vsel %vm248, %v1269, 0
    %1273 = vmatprep.subr.bf16.mxu0 0
    %1274 = vmatpush1.bf16.msra.mxu0 %v1014
    %1275 = vmatprep.subr.bf16.mxu0 0
    %1276 = vmatpush1.bf16.msra.mxu0 %v1015
    %1277 = vmatprep.subr.bf16.mxu0 0
    %1278 = vmatpush1.bf16.msra.mxu0 0
    %1279 = vmatprep.subr.bf16.mxu0 0
    %1280 = vmatpush1.bf16.msra.mxu0 0
    %1281 = vmatprep.subr.bf16.mxu0 0
    %1282 = vmatpush1.bf16.msra.mxu0 0
    %1283 = vmatprep.subr.bf16.mxu0 0
    %1284 = vmatpush1.bf16.msra.mxu0 0
    %1285 = vmatprep.subr.bf16.mxu0 0
    %1286 = vmatpush1.bf16.msra.mxu0 0
    %1287 = vmatprep.subr.bf16.mxu0 0
    %1288 = vmatpush1.bf16.msra.mxu0 0
    %1289 = vmatprep.subr.bf16.mxu0 0
    %1290 = vmatpush1.bf16.msra.mxu0 0
    %1291 = vmatprep.subr.bf16.mxu0 0
    %1292 = vmatpush1.bf16.msra.mxu0 0
    %1293 = vmatprep.subr.bf16.mxu0 0
    %1294 = vmatpush1.bf16.msra.mxu0 0
    %1295 = vmatprep.subr.bf16.mxu0 0
    %1296 = vmatpush1.bf16.msra.mxu0 0
    %1297 = vmatprep.subr.bf16.mxu0 0
    %1298 = vmatpush1.bf16.msra.mxu0 0
    %1299 = vmatprep.subr.bf16.mxu0 0
    %1300 = vmatpush1.bf16.msra.mxu0 0
    %1301 = vmatprep.subr.bf16.mxu0 0
    %1302 = vmatpush1.bf16.msra.mxu0 0
    %1303 = vmatprep.subr.bf16.mxu0 0
    %1304 = vmatpush1.bf16.msra.mxu0 0
    %1305 = vmatprep.mubr.bf16.mxu0 0
    %1306 = vmatmul.mubr.bf16.gmra.mrb[0].mxu0 %v1271
    %v1307 = vpop.f32.mrb[0].mxu0
    %v1308 = vadd.f32 0.0, %v1307
    %v1309 = vpop.f32.mrb[0].mxu0
    %v1310 = vpop.f32.mrb[0].mxu0
    %v1311 = vpop.f32.mrb[0].mxu0
    %1312 = vdwg.mxu0
    %v1314 = vrot.slane %v1308, 2
    %v1316 = vadd.f32 %v991, %v1314
    %v1317 = vtanh.pop %v1316
    %v1318 = vxor.u32 %v1316, 2147483648
    %v1319 = vmul.f32 %v1318, 1.442695
    %v1320 = vpow.pop %v1319
    %v1321 = vadd.f32 %v1320, 1.0
    %v1322 = vrcp.pop %v1321
    %v1323 = vmul.f32 1.0, %v1322
    %v1324 = vsel %vm167, %v1317, %v1323
    %v1326 = vrot.slane %v1253, 6
    %v1328 = vmul.f32 %v1324, %v1326
    %1330 = vrot.lane.b32.xlu0 %v1324, 64
    %v1331 = vpop.permute.xlu0 %1330
    %v1333 = vmul.f32 %v1324, %v1331
    %1335 = vrot.lane.b32.xlu0 %v1333, 32
    %v1336 = vpop.permute.xlu0 %1335
    %v1338 = vadd.f32 %v1328, %v1336
    %v1339 = vtanh.pop %v1338
    %1341 = vrot.lane.b32.xlu0 %v1339, 64
    %v1342 = vpop.permute.xlu0 %1341
    %v1344 = vmul.f32 %v1324, %v1342
    %1346 = vrot.lane.b32.xlu0 %v1344, 32
    %v1347 = vpop.permute.xlu0 %1346
    %1349 = vst.msk [vmem:[#allocation2] sm:$0xc0] %vm583, %v1347
    %v1350 = vpack.c.bf16 %v1344, %v1344
    %v1352 = vrot.slane %v1350, 3
    %1353 = vrot.lane.b32.xlu0 %v1352, 32
    %v1354 = vpop.permute.xlu0 %1353
    %v1356 = vsel %vm248, %v1354, 0
    %1358 = vmatprep.subr.bf16.mxu0 0
    %1359 = vmatpush1.bf16.msra.mxu0 %v1014
    %1360 = vmatprep.subr.bf16.mxu0 0
    %1361 = vmatpush1.bf16.msra.mxu0 %v1015
    %1362 = vmatprep.subr.bf16.mxu0 0
    %1363 = vmatpush1.bf16.msra.mxu0 0
    %1364 = vmatprep.subr.bf16.mxu0 0
    %1365 = vmatpush1.bf16.msra.mxu0 0
    %1366 = vmatprep.subr.bf16.mxu0 0
    %1367 = vmatpush1.bf16.msra.mxu0 0
    %1368 = vmatprep.subr.bf16.mxu0 0
    %1369 = vmatpush1.bf16.msra.mxu0 0
    %1370 = vmatprep.subr.bf16.mxu0 0
    %1371 = vmatpush1.bf16.msra.mxu0 0
    %1372 = vmatprep.subr.bf16.mxu0 0
    %1373 = vmatpush1.bf16.msra.mxu0 0
    %1374 = vmatprep.subr.bf16.mxu0 0
    %1375 = vmatpush1.bf16.msra.mxu0 0
    %1376 = vmatprep.subr.bf16.mxu0 0
    %1377 = vmatpush1.bf16.msra.mxu0 0
    %1378 = vmatprep.subr.bf16.mxu0 0
    %1379 = vmatpush1.bf16.msra.mxu0 0
    %1380 = vmatprep.subr.bf16.mxu0 0
    %1381 = vmatpush1.bf16.msra.mxu0 0
    %1382 = vmatprep.subr.bf16.mxu0 0
    %1383 = vmatpush1.bf16.msra.mxu0 0
    %1384 = vmatprep.subr.bf16.mxu0 0
    %1385 = vmatpush1.bf16.msra.mxu0 0
    %1386 = vmatprep.subr.bf16.mxu0 0
    %1387 = vmatpush1.bf16.msra.mxu0 0
    %1388 = vmatprep.subr.bf16.mxu0 0
    %1389 = vmatpush1.bf16.msra.mxu0 0
    %1390 = vmatprep.mubr.bf16.mxu0 0
    %1391 = vmatmul.mubr.bf16.gmra.mrb[0].mxu0 %v1356
    %v1392 = vpop.f32.mrb[0].mxu0
    %v1393 = vadd.f32 0.0, %v1392
    %v1394 = vpop.f32.mrb[0].mxu0
    %v1395 = vpop.f32.mrb[0].mxu0
    %v1396 = vpop.f32.mrb[0].mxu0
    %1397 = vdwg.mxu0
    %v1398 = vadd.f32 %v994, %v1393
    %v1399 = vtanh.pop %v1398
    %v1400 = vxor.u32 %v1398, 2147483648
    %v1401 = vmul.f32 %v1400, 1.442695
    %v1402 = vpow.pop %v1401
    %v1403 = vadd.f32 %v1402, 1.0
    %v1404 = vrcp.pop %v1403
    %v1405 = vmul.f32 1.0, %v1404
    %v1406 = vsel %vm167, %v1399, %v1405
    %v1408 = vrot.slane %v1338, 6
    %v1410 = vmul.f32 %v1406, %v1408
    %1412 = vrot.lane.b32.xlu0 %v1406, 64
    %v1413 = vpop.permute.xlu0 %1412
    %v1415 = vmul.f32 %v1406, %v1413
    %1417 = vrot.lane.b32.xlu0 %v1415, 32
    %v1418 = vpop.permute.xlu0 %1417
    %v1420 = vadd.f32 %v1410, %v1418
    %v1421 = vtanh.pop %v1420
    %1423 = vrot.lane.b32.xlu0 %v1421, 64
    %v1424 = vpop.permute.xlu0 %1423
    %v1426 = vmul.f32 %v1406, %v1424
    %1428 = vrot.lane.b32.xlu0 %v1426, 32
    %v1429 = vpop.permute.xlu0 %1428
    %1431 = vst.msk [vmem:[#allocation2 + $0x8] sm:$0x3] %vm326, %v1429
    %v1432 = vpack.c.bf16 %v1426, %v1426
    %1434 = vrot.lane.b32.xlu0 %v1432, 32
    %v1435 = vpop.permute.xlu0 %1434
    %v1437 = vsel %vm248, %v1435, 0
    %1439 = vmatprep.subr.bf16.mxu0 0
    %1440 = vmatpush1.bf16.msra.mxu0 %v1014
    %1441 = vmatprep.subr.bf16.mxu0 0
    %1442 = vmatpush1.bf16.msra.mxu0 %v1015
    %1443 = vmatprep.subr.bf16.mxu0 0
    %1444 = vmatpush1.bf16.msra.mxu0 0
    %1445 = vmatprep.subr.bf16.mxu0 0
    %1446 = vmatpush1.bf16.msra.mxu0 0
    %1447 = vmatprep.subr.bf16.mxu0 0
    %1448 = vmatpush1.bf16.msra.mxu0 0
    %1449 = vmatprep.subr.bf16.mxu0 0
    %1450 = vmatpush1.bf16.msra.mxu0 0
    %1451 = vmatprep.subr.bf16.mxu0 0
    %1452 = vmatpush1.bf16.msra.mxu0 0
    %1453 = vmatprep.subr.bf16.mxu0 0
    %1454 = vmatpush1.bf16.msra.mxu0 0
    %1455 = vmatprep.subr.bf16.mxu0 0
    %1456 = vmatpush1.bf16.msra.mxu0 0
    %1457 = vmatprep.subr.bf16.mxu0 0
    %1458 = vmatpush1.bf16.msra.mxu0 0
    %1459 = vmatprep.subr.bf16.mxu0 0
    %1460 = vmatpush1.bf16.msra.mxu0 0
    %1461 = vmatprep.subr.bf16.mxu0 0
    %1462 = vmatpush1.bf16.msra.mxu0 0
    %1463 = vmatprep.subr.bf16.mxu0 0
    %1464 = vmatpush1.bf16.msra.mxu0 0
    %1465 = vmatprep.subr.bf16.mxu0 0
    %1466 = vmatpush1.bf16.msra.mxu0 0
    %1467 = vmatprep.subr.bf16.mxu0 0
    %1468 = vmatpush1.bf16.msra.mxu0 0
    %1469 = vmatprep.subr.bf16.mxu0 0
    %1470 = vmatpush1.bf16.msra.mxu0 0
    %1471 = vmatprep.mubr.bf16.mxu0 0
    %1472 = vmatmul.mubr.bf16.gmra.mrb[0].mxu0 %v1437
    %v1473 = vpop.f32.mrb[0].mxu0
    %v1474 = vadd.f32 0.0, %v1473
    %v1475 = vpop.f32.mrb[0].mxu0
    %v1476 = vpop.f32.mrb[0].mxu0
    %v1477 = vpop.f32.mrb[0].mxu0
    %1478 = vdwg.mxu0
    %v1480 = vrot.slane %v1474, 6
    %v1482 = vadd.f32 %v994, %v1480
    %v1483 = vtanh.pop %v1482
    %v1484 = vxor.u32 %v1482, 2147483648
    %v1485 = vmul.f32 %v1484, 1.442695
    %v1486 = vpow.pop %v1485
    %v1487 = vadd.f32 %v1486, 1.0
    %v1488 = vrcp.pop %v1487
    %v1489 = vmul.f32 1.0, %v1488
    %v1490 = vsel %vm167, %v1483, %v1489
    %v1492 = vrot.slane %v1420, 6
    %v1494 = vmul.f32 %v1490, %v1492
    %1496 = vrot.lane.b32.xlu0 %v1490, 64
    %v1497 = vpop.permute.xlu0 %1496
    %v1499 = vmul.f32 %v1490, %v1497
    %1501 = vrot.lane.b32.xlu0 %v1499, 32
    %v1502 = vpop.permute.xlu0 %1501
    %v1504 = vadd.f32 %v1494, %v1502
    %v1505 = vtanh.pop %v1504
    %1507 = vrot.lane.b32.xlu0 %v1505, 64
    %v1508 = vpop.permute.xlu0 %1507
    %v1510 = vmul.f32 %v1490, %v1508
    %1512 = vrot.lane.b32.xlu0 %v1510, 32
    %v1513 = vpop.permute.xlu0 %1512
    %1515 = vst.msk [vmem:[#allocation2 + $0x8] sm:$0xc] %vm411, %v1513
    %v1516 = vpack.c.bf16 %v1510, %v1510
    %v1518 = vrot.slane %v1516, 1
    %1519 = vrot.lane.b32.xlu0 %v1518, 32
    %v1520 = vpop.permute.xlu0 %1519
    %v1522 = vsel %vm248, %v1520, 0
    %1524 = vmatprep.subr.bf16.mxu0 0
    %1525 = vmatpush1.bf16.msra.mxu0 %v1014
    %1526 = vmatprep.subr.bf16.mxu0 0
    %1527 = vmatpush1.bf16.msra.mxu0 %v1015
    %1528 = vmatprep.subr.bf16.mxu0 0
    %1529 = vmatpush1.bf16.msra.mxu0 0
    %1530 = vmatprep.subr.bf16.mxu0 0
    %1531 = vmatpush1.bf16.msra.mxu0 0
    %1532 = vmatprep.subr.bf16.mxu0 0
    %1533 = vmatpush1.bf16.msra.mxu0 0
    %1534 = vmatprep.subr.bf16.mxu0 0
    %1535 = vmatpush1.bf16.msra.mxu0 0
    %1536 = vmatprep.subr.bf16.mxu0 0
    %1537 = vmatpush1.bf16.msra.mxu0 0
    %1538 = vmatprep.subr.bf16.mxu0 0
    %1539 = vmatpush1.bf16.msra.mxu0 0
    %1540 = vmatprep.subr.bf16.mxu0 0
    %1541 = vmatpush1.bf16.msra.mxu0 0
    %1542 = vmatprep.subr.bf16.mxu0 0
    %1543 = vmatpush1.bf16.msra.mxu0 0
    %1544 = vmatprep.subr.bf16.mxu0 0
    %1545 = vmatpush1.bf16.msra.mxu0 0
    %1546 = vmatprep.subr.bf16.mxu0 0
    %1547 = vmatpush1.bf16.msra.mxu0 0
    %1548 = vmatprep.subr.bf16.mxu0 0
    %1549 = vmatpush1.bf16.msra.mxu0 0
    %1550 = vmatprep.subr.bf16.mxu0 0
    %1551 = vmatpush1.bf16.msra.mxu0 0
    %1552 = vmatprep.subr.bf16.mxu0 0
    %1553 = vmatpush1.bf16.msra.mxu0 0
    %1554 = vmatprep.subr.bf16.mxu0 0
    %1555 = vmatpush1.bf16.msra.mxu0 0
    %1556 = vmatprep.mubr.bf16.mxu0 0
    %1557 = vmatmul.mubr.bf16.gmra.mrb[0].mxu0 %v1522
    %v1558 = vpop.f32.mrb[0].mxu0
    %v1559 = vadd.f32 0.0, %v1558
    %v1560 = vpop.f32.mrb[0].mxu0
    %v1561 = vpop.f32.mrb[0].mxu0
    %v1562 = vpop.f32.mrb[0].mxu0
    %1563 = vdwg.mxu0
    %v1565 = vrot.slane %v1559, 4
    %v1567 = vadd.f32 %v994, %v1565
    %v1568 = vtanh.pop %v1567
    %v1569 = vxor.u32 %v1567, 2147483648
    %v1570 = vmul.f32 %v1569, 1.442695
    %v1571 = vpow.pop %v1570
    %v1572 = vadd.f32 %v1571, 1.0
    %v1573 = vrcp.pop %v1572
    %v1574 = vmul.f32 1.0, %v1573
    %v1575 = vsel %vm167, %v1568, %v1574
    %v1577 = vrot.slane %v1504, 6
    %v1579 = vmul.f32 %v1575, %v1577
    %1581 = vrot.lane.b32.xlu0 %v1575, 64
    %v1582 = vpop.permute.xlu0 %1581
    %v1584 = vmul.f32 %v1575, %v1582
    %1586 = vrot.lane.b32.xlu0 %v1584, 32
    %v1587 = vpop.permute.xlu0 %1586
    %v1589 = vadd.f32 %v1579, %v1587
    %v1590 = vtanh.pop %v1589
    %1592 = vrot.lane.b32.xlu0 %v1590, 64
    %v1593 = vpop.permute.xlu0 %1592
    %v1595 = vmul.f32 %v1575, %v1593
    %1597 = vrot.lane.b32.xlu0 %v1595, 32
    %v1598 = vpop.permute.xlu0 %1597
    %1600 = vst.msk [vmem:[#allocation2 + $0x8] sm:$0x30] %vm497, %v1598
    %v1601 = vpack.c.bf16 %v1595, %v1595
    %v1603 = vrot.slane %v1601, 2
    %1604 = vrot.lane.b32.xlu0 %v1603, 32
    %v1605 = vpop.permute.xlu0 %1604
    %v1607 = vsel %vm248, %v1605, 0
    %1609 = vmatprep.subr.bf16.mxu0 0
    %1610 = vmatpush1.bf16.msra.mxu0 %v1014
    %1611 = vmatprep.subr.bf16.mxu0 0
    %1612 = vmatpush1.bf16.msra.mxu0 %v1015
    %1613 = vmatprep.subr.bf16.mxu0 0
    %1614 = vmatpush1.bf16.msra.mxu0 0
    %1615 = vmatprep.subr.bf16.mxu0 0
    %1616 = vmatpush1.bf16.msra.mxu0 0
    %1617 = vmatprep.subr.bf16.mxu0 0
    %1618 = vmatpush1.bf16.msra.mxu0 0
    %1619 = vmatprep.subr.bf16.mxu0 0
    %1620 = vmatpush1.bf16.msra.mxu0 0
    %1621 = vmatprep.subr.bf16.mxu0 0
    %1622 = vmatpush1.bf16.msra.mxu0 0
    %1623 = vmatprep.subr.bf16.mxu0 0
    %1624 = vmatpush1.bf16.msra.mxu0 0
    %1625 = vmatprep.subr.bf16.mxu0 0
    %1626 = vmatpush1.bf16.msra.mxu0 0
    %1627 = vmatprep.subr.bf16.mxu0 0
    %1628 = vmatpush1.bf16.msra.mxu0 0
    %1629 = vmatprep.subr.bf16.mxu0 0
    %1630 = vmatpush1.bf16.msra.mxu0 0
    %1631 = vmatprep.subr.bf16.mxu0 0
    %1632 = vmatpush1.bf16.msra.mxu0 0
    %1633 = vmatprep.subr.bf16.mxu0 0
    %1634 = vmatpush1.bf16.msra.mxu0 0
    %1635 = vmatprep.subr.bf16.mxu0 0
    %1636 = vmatpush1.bf16.msra.mxu0 0
    %1637 = vmatprep.subr.bf16.mxu0 0
    %1638 = vmatpush1.bf16.msra.mxu0 0
    %1639 = vmatprep.subr.bf16.mxu0 0
    %1640 = vmatpush1.bf16.msra.mxu0 0
    %1641 = vmatprep.mubr.bf16.mxu0 0
    %1642 = vmatmul.mubr.bf16.gmra.mrb[0].mxu0 %v1607
    %v1643 = vpop.f32.mrb[0].mxu0
    %v1644 = vadd.f32 0.0, %v1643
    %v1645 = vpop.f32.mrb[0].mxu0
    %v1646 = vpop.f32.mrb[0].mxu0
    %v1647 = vpop.f32.mrb[0].mxu0
    %1648 = vdwg.mxu0
    %v1650 = vrot.slane %v1644, 2
    %v1652 = vadd.f32 %v994, %v1650
    %v1653 = vtanh.pop %v1652
    %v1654 = vxor.u32 %v1652, 2147483648
    %v1655 = vmul.f32 %v1654, 1.442695
    %v1656 = vpow.pop %v1655
    %v1657 = vadd.f32 %v1656, 1.0
    %v1658 = vrcp.pop %v1657
    %v1659 = vmul.f32 1.0, %v1658
    %v1660 = vsel %vm167, %v1653, %v1659
    %v1662 = vrot.slane %v1589, 6
    %v1664 = vmul.f32 %v1660, %v1662
    %1666 = vrot.lane.b32.xlu0 %v1660, 64
    %v1667 = vpop.permute.xlu0 %1666
    %v1669 = vmul.f32 %v1660, %v1667
    %1671 = vrot.lane.b32.xlu0 %v1669, 32
    %v1672 = vpop.permute.xlu0 %1671
    %v1674 = vadd.f32 %v1664, %v1672
    %v1675 = vtanh.pop %v1674
    %1677 = vrot.lane.b32.xlu0 %v1675, 64
    %v1678 = vpop.permute.xlu0 %1677
    %v1680 = vmul.f32 %v1660, %v1678
    %1682 = vrot.lane.b32.xlu0 %v1680, 32
    %v1683 = vpop.permute.xlu0 %1682
    %1685 = vst.msk [vmem:[#allocation2 + $0x8] sm:$0xc0] %vm583, %v1683
    %s1686 = scalar_lea.vmem [#allocation3], 2
    %1687 = vst.msk [vmem:[%s1686 - $0x6] sm:$0xc0] %vm583, %v1683
    %1689 = vrot.lane.b32.xlu0 %v1674, 96
    %v1690 = vpop.permute.xlu0 %1689
    %s1692 = scalar_lea.vmem [#allocation5], 2
    %1693 = vst.msk [vmem:[%s1692 - $0x6] sm:$0xc0] %vm583, %v1690
    %v1694 = vld [vmem:[#allocation2] sm:$0xff]
    %v1695 = vld [vmem:[#allocation2 + $0x8] sm:$0xff]
    %v1696 = vpack.c.bf16 %v1695, %v1694
    %v1697 = vld [vmem:[%s10] sm:$0xf]
    %v1698 = vld [vmem:[%s10 + $0x4] sm:$0xf]
    %v1699 = vld [vmem:[%s10 + $0x8] sm:$0xf]
    %v1700 = vld [vmem:[%s10 + $0xc] sm:$0xf]
    %v1701 = vld [vmem:[%s11] sm:$0x1]
    %v1703 = vlaneseq
    %v1704 = vshrl.u32 %v1703, 7
    %v1705 = vsub.s32 0, %v1704
    %v1706 = vrot.slane %v1701, %v1705
    %v1712 = vunpack.c.l.b16 %v1697
    %v1713 = vunpack.c.l.b16 %v1698
    %v1714 = vunpack.c.l.b16 %v1699
    %v1715 = vunpack.c.l.b16 %v1700
    %v1716 = vpack.c.b16 %v1713, %v1712
    %v1717 = vpack.c.b16 %v1715, %v1714
    %v1721 = vsel %vm248, %v1696, 0
    %1723 = vmatprep.subr.bf16.mxu0 0
    %1724 = vmatpush1.bf16.msra.mxu0 %v1716
    %1725 = vmatprep.subr.bf16.mxu0 0
    %1726 = vmatpush1.bf16.msra.mxu0 %v1717
    %1727 = vmatprep.subr.bf16.mxu0 0
    %1728 = vmatpush1.bf16.msra.mxu0 0
    %1729 = vmatprep.subr.bf16.mxu0 0
    %1730 = vmatpush1.bf16.msra.mxu0 0
    %1731 = vmatprep.subr.bf16.mxu0 0
    %1732 = vmatpush1.bf16.msra.mxu0 0
    %1733 = vmatprep.subr.bf16.mxu0 0
    %1734 = vmatpush1.bf16.msra.mxu0 0
    %1735 = vmatprep.subr.bf16.mxu0 0
    %1736 = vmatpush1.bf16.msra.mxu0 0
    %1737 = vmatprep.subr.bf16.mxu0 0
    %1738 = vmatpush1.bf16.msra.mxu0 0
    %1739 = vmatprep.subr.bf16.mxu0 0
    %1740 = vmatpush1.bf16.msra.mxu0 0
    %1741 = vmatprep.subr.bf16.mxu0 0
    %1742 = vmatpush1.bf16.msra.mxu0 0
    %1743 = vmatprep.subr.bf16.mxu0 0
    %1744 = vmatpush1.bf16.msra.mxu0 0
    %1745 = vmatprep.subr.bf16.mxu0 0
    %1746 = vmatpush1.bf16.msra.mxu0 0
    %1747 = vmatprep.subr.bf16.mxu0 0
    %1748 = vmatpush1.bf16.msra.mxu0 0
    %1749 = vmatprep.subr.bf16.mxu0 0
    %1750 = vmatpush1.bf16.msra.mxu0 0
    %1751 = vmatprep.subr.bf16.mxu0 0
    %1752 = vmatpush1.bf16.msra.mxu0 0
    %1753 = vmatprep.subr.bf16.mxu0 0
    %1754 = vmatpush1.bf16.msra.mxu0 0
    %1755 = vmatprep.mubr.bf16.mxu0 0
    %1756 = vmatmul.mubr.bf16.gmra.mrb[0].mxu0 %v1721
    %v1757 = vpop.f32.mrb[0].mxu0
    %v1758 = vadd.f32 %v1706, %v1757
    %v1759 = vpop.f32.mrb[0].mxu0
    %v1760 = vpop.f32.mrb[0].mxu0
    %v1761 = vadd.f32 %v1706, %v1760
    %v1762 = vpop.f32.mrb[0].mxu0
    %1763 = vdwg.mxu0
    %v1764 = vmul.f32 %v1758, 0.5
    %v1765 = vmul.f32 %v1761, 0.5
    %v1766 = vmul.f32 %v1758, 0.70710677
    %v1767 = vmul.f32 %v1761, 0.70710677
    %v1768 = verf.f32.pop %v1766
    %v1769 = verf.f32.pop %v1767
    %v1770 = vadd.f32 %v1768, 1.0
    %v1771 = vadd.f32 %v1769, 1.0
    %v1772 = vmul.f32 %v1764, %v1770
    %v1773 = vmul.f32 %v1765, %v1771
    %v1774 = vpack.c.bf16 %v1773, %v1772
    %v1775 = vld [vmem:[%s12] sm:$0xf]
    %v1776 = vld [vmem:[%s13] sm:$0x1]
    %v1778 = vlaneseq
    %v1779 = vshrl.u32 %v1778, 7
    %v1780 = vsub.s32 0, %v1779
    %v1781 = vrot.slane %v1776, %v1780
    %vm1783 = vcmask 64512
    %v1785 = vsel %vm1783, %v1774, 0
    %vm1787 = vcmask 1043456
    %v1789 = vsel %vm1787, %v1775, 0
    %1791 = vmatprep.subr.bf16.mxu0 0
    %1792 = vmatpush1.bf16.msra.mxu0 %v1789
    %1793 = vmatprep.subr.bf16.mxu0 0
    %1794 = vmatpush1.bf16.msra.mxu0 0
    %1795 = vmatprep.subr.bf16.mxu0 0
    %1796 = vmatpush1.bf16.msra.mxu0 0
    %1797 = vmatprep.subr.bf16.mxu0 0
    %1798 = vmatpush1.bf16.msra.mxu0 0
    %1799 = vmatprep.subr.bf16.mxu0 0
    %1800 = vmatpush1.bf16.msra.mxu0 0
    %1801 = vmatprep.subr.bf16.mxu0 0
    %1802 = vmatpush1.bf16.msra.mxu0 0
    %1803 = vmatprep.subr.bf16.mxu0 0
    %1804 = vmatpush1.bf16.msra.mxu0 0
    %1805 = vmatprep.subr.bf16.mxu0 0
    %1806 = vmatpush1.bf16.msra.mxu0 0
    %1807 = vmatprep.subr.bf16.mxu0 0
    %1808 = vmatpush1.bf16.msra.mxu0 0
    %1809 = vmatprep.subr.bf16.mxu0 0
    %1810 = vmatpush1.bf16.msra.mxu0 0
    %1811 = vmatprep.subr.bf16.mxu0 0
    %1812 = vmatpush1.bf16.msra.mxu0 0
    %1813 = vmatprep.subr.bf16.mxu0 0
    %1814 = vmatpush1.bf16.msra.mxu0 0
    %1815 = vmatprep.subr.bf16.mxu0 0
    %1816 = vmatpush1.bf16.msra.mxu0 0
    %1817 = vmatprep.subr.bf16.mxu0 0
    %1818 = vmatpush1.bf16.msra.mxu0 0
    %1819 = vmatprep.subr.bf16.mxu0 0
    %1820 = vmatpush1.bf16.msra.mxu0 0
    %1821 = vmatprep.subr.bf16.mxu0 0
    %1822 = vmatpush1.bf16.msra.mxu0 0
    %1823 = vmatprep.mubr.bf16.mxu0 0
    %1824 = vmatmul.mubr.bf16.gmra.mrb[0].mxu0 %v1785
    %v1825 = vpop.f32.mrb[0].mxu0
    %v1826 = vadd.f32 %v1781, %v1825
    %v1827 = vpop.f32.mrb[0].mxu0
    %v1828 = vpop.f32.mrb[0].mxu0
    %v1829 = vadd.f32 %v1781, %v1828
    %v1830 = vpop.f32.mrb[0].mxu0
    %1831 = vdwg.mxu0
    %v1832 = vmul.f32 %v1826, 0.5
    %v1833 = vmul.f32 %v1829, 0.5
    %v1834 = vmul.f32 %v1826, 0.70710677
    %v1835 = vmul.f32 %v1829, 0.70710677
    %v1836 = verf.f32.pop %v1834
    %v1837 = verf.f32.pop %v1835
    %v1838 = vadd.f32 %v1836, 1.0
    %v1839 = vadd.f32 %v1837, 1.0
    %v1840 = vmul.f32 %v1832, %v1838
    %v1841 = vmul.f32 %v1833, %v1839
    %v1842 = vpack.c.bf16 %v1841, %v1840
    %v1843 = vld [vmem:[%s14] sm:$0x1]
    %v1844 = vld [vmem:[%s15] sm:$0x1]
    %v1846 = vlaneseq
    %v1847 = vshrl.u32 %v1846, 7
    %v1848 = vsub.s32 0, %v1847
    %v1849 = vrot.slane %v1844, %v1848
    %vm1851 = vcmask 15360
    %v1853 = vsel %vm1851, %v1842, 0
    %vm1855 = vcmask 1040384
    %v1857 = vsel %vm1855, %v1843, 0
    %1859 = vmatprep.subr.bf16.mxu0 0
    %1860 = vmatpush1.bf16.msra.mxu0 %v1857
    %1861 = vmatprep.subr.bf16.mxu0 0
    %1862 = vmatpush1.bf16.msra.mxu0 0
    %1863 = vmatprep.subr.bf16.mxu0 0
    %1864 = vmatpush1.bf16.msra.mxu0 0
    %1865 = vmatprep.subr.bf16.mxu0 0
    %1866 = vmatpush1.bf16.msra.mxu0 0
    %1867 = vmatprep.subr.bf16.mxu0 0
    %1868 = vmatpush1.bf16.msra.mxu0 0
    %1869 = vmatprep.subr.bf16.mxu0 0
    %1870 = vmatpush1.bf16.msra.mxu0 0
    %1871 = vmatprep.subr.bf16.mxu0 0
    %1872 = vmatpush1.bf16.msra.mxu0 0
    %1873 = vmatprep.subr.bf16.mxu0 0
    %1874 = vmatpush1.bf16.msra.mxu0 0
    %1875 = vmatprep.subr.bf16.mxu0 0
    %1876 = vmatpush1.bf16.msra.mxu0 0
    %1877 = vmatprep.subr.bf16.mxu0 0
    %1878 = vmatpush1.bf16.msra.mxu0 0
    %1879 = vmatprep.subr.bf16.mxu0 0
    %1880 = vmatpush1.bf16.msra.mxu0 0
    %1881 = vmatprep.subr.bf16.mxu0 0
    %1882 = vmatpush1.bf16.msra.mxu0 0
    %1883 = vmatprep.subr.bf16.mxu0 0
    %1884 = vmatpush1.bf16.msra.mxu0 0
    %1885 = vmatprep.subr.bf16.mxu0 0
    %1886 = vmatpush1.bf16.msra.mxu0 0
    %1887 = vmatprep.subr.bf16.mxu0 0
    %1888 = vmatpush1.bf16.msra.mxu0 0
    %1889 = vmatprep.subr.bf16.mxu0 0
    %1890 = vmatpush1.bf16.msra.mxu0 0
    %1891 = vmatprep.mubr.bf16.mxu0 0
    %1892 = vmatmul.mubr.bf16.gmra.mrb[0].mxu0 %v1853
    %v1893 = vpop.f32.mrb[0].mxu0
    %v1894 = vadd.f32 %v1849, %v1893
    %v1895 = vpop.f32.mrb[0].mxu0
    %v1896 = vpop.f32.mrb[0].mxu0
    %v1897 = vadd.f32 %v1849, %v1896
    %v1898 = vpop.f32.mrb[0].mxu0
    %1899 = vdwg.mxu0
    %1900 = vst.msk [vmem:[%s16] sm:$0xff] %vm1783, %v1894
    %1901 = vst.msk [vmem:[%s16 + $0x8] sm:$0xff] %vm1783, %v1897
    // Predicated region
    $region66: #{char_lstm_forward.1} parent=1 // pred_check
      _
    $region67: #{char_lstm_forward.1} parent=1 // pred_check_branch
      %1903 = sbr.rel (0) target = $region69
    $region68: #{char_lstm_forward.1} parent=1 // pred_region
      _
    $region69: #{char_lstm_forward.1} parent=1 // pred_fallthru
      _
    // Predicated region
    $region70: #{char_lstm_forward.1} parent=1 // pred_check
      _
    $region71: #{char_lstm_forward.1} parent=1 // pred_check_branch
      %1905 = sbr.rel (0) target = $region73
    $region72: #{char_lstm_forward.1} parent=1 // pred_region
      %s1907 = ssub.s32 64, 64
      %1908 = vsyncadd [#allocation4], %s1907
      %s1909 = sshll.u32 [#allocation3], 4
      %s1910 = int_to_ptr.vmem [resolvable:$true] %s1909
      %1915 = dma.vmem_to_hbm [thread:$0]  %s1910, 64, %s17, [#allocation4], 32, 32, 2
    $region73: #{char_lstm_forward.1} parent=1 // pred_fallthru
      _
    // Predicated region
    $region74: #{char_lstm_forward.1} parent=1 // pred_check
      _
    $region75: #{char_lstm_forward.1} parent=1 // pred_check_branch
      %1917 = sbr.rel (0) target = $region77
    $region76: #{char_lstm_forward.1} parent=1 // pred_region
      %s1919 = ssub.s32 64, 64
      %1920 = vsyncadd [#allocation6], %s1919
      %s1921 = sshll.u32 [#allocation5], 4
      %s1922 = int_to_ptr.vmem [resolvable:$true] %s1921
      %1927 = dma.vmem_to_hbm [thread:$0]  %s1922, 64, %s18, [#allocation6], 32, 32, 2
    $region77: #{char_lstm_forward.1} parent=1 // pred_fallthru
      _
    // Predicated region
    $region78: #{char_lstm_forward.1} parent=1 // pred_check
      _
    $region79: #{char_lstm_forward.1} parent=1 // pred_check_branch
      %1929 = sbr.rel (0) target = $region81
    $region80: #{char_lstm_forward.1} parent=1 // pred_region
      _
    $region81: #{char_lstm_forward.1} parent=1 // pred_fallthru
      _
    // Predicated region
    $region82: #{char_lstm_forward.1} parent=1 // pred_check
      _
    $region83: #{char_lstm_forward.1} parent=1 // pred_check_branch
      %1931 = sbr.rel (0) target = $region85
    $region84: #{char_lstm_forward.1} parent=1 // pred_region
      %1932 = dma.done [#allocation4], 64
    $region85: #{char_lstm_forward.1} parent=1 // pred_fallthru
      _
    // Predicated region
    $region86: #{char_lstm_forward.1} parent=1 // pred_check
      _
    $region87: #{char_lstm_forward.1} parent=1 // pred_check_branch
      %1934 = sbr.rel (0) target = $region89
    $region88: #{char_lstm_forward.1} parent=1 // pred_region
      %1935 = dma.done [#allocation6], 64
    $region89: #{char_lstm_forward.1} parent=1 // pred_fallthru
      _
    %1936 = vsyncpa [#allocation4], 1
    %1937 = vsyncpa [#allocation6], 1

</llo_original>
